<compile_context>
chip_gen: v7x
topology: tpu7x:2x2x1
jax: 0.10.0
libtpu: 0.0.40
codegen_flags: <defaults>
</compile_context>

<pallas_src>
import jax
import jax.numpy as jnp
from jax.experimental import pallas as pl
from jax.experimental.pallas import tpu as pltpu


def _rup8(n):
  return ((n + 7) // 8) * 8


def _head_offsets(H):
  """Sublane-aligned row offsets of the fused head-weight blocks in the packed array."""
  Hh = H // 2
  rows = (H,          # [mean_fc1 | std_fc1]                    (H,    2*Hh)
          2 * Hh,     # blockdiag(mean_mid, std_mid)            (2*Hh, 2*Hh)
          2 * Hh,     # blockdiag(mean_fc2, std_fc2) as 2 cols  (2*Hh, 2)
          H + 2,      # dev_fc1                                 (H+2,  Hh+1)
          Hh + 1)     # dev_fc2                                 (Hh+1, 1)
  offs, off = [], 0
  for r in rows:
    offs.append(off)
    off += _rup8(r)
  return offs, off


def salstm4_kernel(x_ref, eps_ref, w_ih_ref, w_hh_ref, head_w_ref, vec_ref, out_ref):
  TB, Din = x_ref.shape            # x is time-major, flattened: row = t*B + b
  B = eps_ref.shape[0]
  T = TB // B
  H = w_hh_ref.shape[0]
  Hh = H // 2
  f32 = jnp.float32
  o_h1, o_hm, o_h2, o_d1, o_d2 = _head_offsets(H)[0]

  # ---- packed small vector params (single load, then static slices) ----
  vec = vec_ref[...]                       # (6, 4H)
  lstm_b = vec[0:1, :]                     # (1, 4H)   b_ih + b_hh
  att_w = vec[1:2, 0:H]                    # (1, H)    attention_layer.weight
  h1_b = vec[2:3, 0:2 * Hh]                # (1, 2Hh)  [mean_fc1.b | std_fc1.b]
  hm_b = vec[3:4, 0:2 * Hh]                # (1, 2Hh)  [0 | std_mid.b]
  h2_b = vec[4:5, 0:2]                     # (1, 2)    [0, std_fc2.b]
  d2_b = vec[4:5, 2:3]                     # (1, 1)    dev_fc2.b
  d1_b = vec[5:6, 0:Hh + 1]                # (1, Hh+1) dev_fc1.b

  x = x_ref[...].astype(f32)               # (T*B, Din), original (un-normalized) values

  # ---- input normalization (reference: x[:,:,0:2] /= (maxx[0:2] + 1e-6), where
  #      maxx[0:2] is batch-0's per-feature max over time), applied once ----
  row = jax.lax.broadcasted_iota(jnp.int32, (TB, Din), 0)
  is_b0 = (row % B) == 0                                   # rows belonging to batch 0
  m_b0 = jnp.max(jnp.where(is_b0, jnp.abs(x), 0.0), axis=0, keepdims=True)  # (1, Din)
  maxx0 = m_b0[:, 0:1]                                     # maxx[0] for the final rescale
  lane = jax.lax.broadcasted_iota(jnp.int32, (1, Din), 1)
  inv_scale = jnp.where(lane < 2, pl.reciprocal(m_b0 + 1e-6, approx=True),
                        jnp.ones_like(m_b0))               # only features 0,1 are scaled
  x_n = x * inv_scale                                      # broadcast over all rows

  # ---- one matmul for the input projection of all timesteps (bias hoisted) ----
  xw = jnp.dot(x_n, w_ih_ref[...], preferred_element_type=f32) + lstm_b   # (T*B, 4H)
  w_hh = w_hh_ref[...]                                                    # (H, 4H)

  # ---- fully unrolled serial LSTM recurrence; state + attention stats in vregs ----
  h = jnp.zeros((B, H), f32)
  c = jnp.zeros((B, H), f32)
  l_acc = jnp.zeros((B, 1), f32)           # online-softmax denominator (sum of exp)
  a_acc = jnp.zeros((B, H), f32)           # sum_t exp(et_t) * h_t

  for t in range(T):                       # T static & small -> unrolled, static slices
    g = xw[t * B:(t + 1) * B, :] + jnp.dot(h, w_hh, preferred_element_type=f32)
    sig = jax.nn.sigmoid(g)                # full-width (EUP slot is idle anyway)
    th = jnp.tanh(g)
    c = sig[:, H:2 * H] * c + sig[:, 0:H] * th[:, 2 * H:3 * H]   # f*c + i*g
    h = sig[:, 3 * H:4 * H] * jnp.tanh(c)                         # o*tanh(c)
    # online softmax attention: et = tanh(h . att_w) is in [-1, 1] -> exp is safe
    et = jnp.tanh(jnp.sum(h * att_w, axis=-1, keepdims=True))     # (B, 1)
    w_t = jnp.exp(et)
    l_acc = l_acc + w_t
    a_acc = a_acc + w_t * h

  att_out = a_acc * pl.reciprocal(l_acc, approx=True)             # (B, H)
  out = jnp.maximum(att_out, 0.0)          # relu (dropout is identity in eval)

  dot = lambda a, w: jnp.dot(a, w, preferred_element_type=f32)

  # ---- fused mean/std heads (column-concatenated / block-diagonal weights) ----
  h1_w = head_w_ref[pl.ds(o_h1, H), :]                       # (H,   2Hh)
  hm_w = head_w_ref[pl.ds(o_hm, 2 * Hh), :]                  # (2Hh, 2Hh)
  h2_w = head_w_ref[pl.ds(o_h2, 2 * Hh), :][:, 0:2]          # (2Hh, 2)
  d1_w = head_w_ref[pl.ds(o_d1, H + 2), :][:, 0:Hh + 1]      # (H+2, Hh+1)
  d2_w = head_w_ref[pl.ds(o_d2, Hh + 1), :][:, 0:1]          # (Hh+1, 1)

  h1 = jnp.maximum(dot(out, h1_w) + h1_b, 0.0)    # relu(mean_fc1 | std_fc1)
  h2 = jnp.tanh(dot(h1, hm_w) + hm_b)             # tanh(mean_mid | std_mid)
  ms = dot(h2, h2_w) + h2_b                       # (B, 2): [mean, pre-exp std]
  out_m = ms[:, 0:1]
  out_std = jnp.exp(ms[:, 1:2])

  # ---- dev head ----
  cat = jnp.concatenate([out, out_m, out_std], axis=-1)      # (B, H+2)
  dev = jnp.tanh(dot(cat, d1_w) + d1_b)
  out_dev = jnp.exp((dot(dev, d2_w) + d2_b) * 0.25)

  # NOTE: the reference's `out = self.fc(out)` is immediately overwritten and never
  # reaches the returned value, so the fc head (and its weights) are omitted.

  eps = eps_ref[...].astype(f32)                             # (B, 1) N(0,1) noise
  randout = eps * out_std + out_m
  final = jnp.tanh(randout) * (1.0 + out_dev) * (1.0 + out_dev)
  out_ref[...] = (final * maxx0).astype(out_ref.dtype)       # * maxx[0]; base_val None -> +0


def init_params(key, input_dim, hidden_dim, output_dim=1):
  """Deterministic synthetic parameters in kernel layout (in_features, out_features)."""
  H, Din = hidden_dim, input_dim
  Hh = H // 2

  def nrm(k, shape, scale=0.1):
    return scale * jax.random.normal(k, shape, dtype=jnp.float32)

  ks = jax.random.split(key, 18)
  return dict(
      w_ih=nrm(ks[0], (Din, 4 * H)),
      w_hh=nrm(ks[1], (H, 4 * H)),
      b=nrm(ks[2], (1, 4 * H)),             # b_ih + b_hh combined
      att_w=nrm(ks[3], (1, H)),             # attention_layer.weight (1, H)
      m1w=nrm(ks[4], (H, Hh)), m1b=nrm(ks[5], (1, Hh)),
      mmw=nrm(ks[6], (Hh, Hh)),             # mean_mid (no bias)
      m2w=nrm(ks[7], (Hh, 1)),              # mean_fc2 (no bias)
      s1w=nrm(ks[8], (H, Hh)), s1b=nrm(ks[9], (1, Hh)),
      smw=nrm(ks[10], (Hh, Hh)), smb=nrm(ks[11], (1, Hh)),
      s2w=nrm(ks[12], (Hh, 1)), s2b=nrm(ks[13], (1, 1)),
      d1w=nrm(ks[14], (H + 2, Hh + 1)), d1b=nrm(ks[15], (1, Hh + 1)),
      d2w=nrm(ks[16], (Hh + 1, 1)), d2b=nrm(ks[17], (1, 1)),
      # fc.{weight,bias} omitted: dead in the reference forward (output overwritten).
  )


def pack_params(p):
  """Fuse/pack the many tiny head tensors into two VMEM-friendly arrays (done once)."""
  H = p["w_hh"].shape[0]
  Hh = H // 2
  f32 = jnp.float32

  head1_w = jnp.concatenate([p["m1w"], p["s1w"]], axis=1)          # (H, 2Hh)
  headmid_w = jnp.zeros((2 * Hh, 2 * Hh), f32)
  headmid_w = headmid_w.at[:Hh, :Hh].set(p["mmw"])
  headmid_w = headmid_w.at[Hh:, Hh:].set(p["smw"])
  head2_w = jnp.zeros((2 * Hh, 2), f32)
  head2_w = head2_w.at[:Hh, 0:1].set(p["m2w"])
  head2_w = head2_w.at[Hh:, 1:2].set(p["s2w"])

  blocks = [head1_w, headmid_w, head2_w, p["d1w"], p["d2w"]]
  offs, total_rows = _head_offsets(H)
  head_w = jnp.zeros((total_rows, 2 * Hh), f32)
  for off, blk in zip(offs, blocks):
    r, cdim = blk.shape
    head_w = head_w.at[off:off + r, :cdim].set(blk)

  vec = jnp.zeros((6, 4 * H), f32)
  vec = vec.at[0, :].set(p["b"][0])
  vec = vec.at[1, :H].set(p["att_w"][0])
  vec = vec.at[2, :2 * Hh].set(jnp.concatenate([p["m1b"][0], p["s1b"][0]]))
  vec = vec.at[3, Hh:2 * Hh].set(p["smb"][0])        # mean_mid has no bias
  vec = vec.at[4, 1].set(p["s2b"][0, 0])             # lane 0 stays 0 (mean_fc2 no bias)
  vec = vec.at[4, 2].set(p["d2b"][0, 0])
  vec = vec.at[5, :Hh + 1].set(p["d1b"][0])

  return dict(w_ih=p["w_ih"], w_hh=p["w_hh"], head_w=head_w, vec=vec)


def salstm4_forward(x_btd, eps, packed):
  """x_btd: (B, T, Din) float32 (PyTorch batch-first layout); eps: (B, 1) N(0,1) noise."""
  B, T, Din = x_btd.shape
  # time-major & flattened so the kernel does one input-projection matmul for all t
  x_flat = jnp.transpose(x_btd, (1, 0, 2)).reshape(T * B, Din).astype(jnp.float32)
  args = (x_flat, eps.astype(jnp.float32), packed["w_ih"], packed["w_hh"],
          packed["head_w"], packed["vec"])
  # TODO(synk): if B grows, add a batch grid with dimension_semantics=("parallel",)
  # so v7x's second TensorCore runs its own slice of the (B-parallel) recurrence.
  return pl.pallas_call(
      salstm4_kernel,
      out_shape=jax.ShapeDtypeStruct((B, 1), jnp.float32),
      in_specs=[pl.BlockSpec(memory_space=pltpu.MemorySpace.VMEM)] * len(args),
      out_specs=pl.BlockSpec(memory_space=pltpu.MemorySpace.VMEM),
  )(*args)


if __name__ == "__main__":
  B, T, DIN, H = 2, 8, 4, 32     # batch, seq_length, input_dim, hidden_dim (output_dim=1)
  key = jax.random.PRNGKey(0)
  kx, keps, kp = jax.random.split(key, 3)
  x = jax.random.normal(kx, (B, T, DIN), dtype=jnp.float32)
  # stochastic=True noise, sampled deterministically on the host.
  eps = jax.random.normal(keps, (B, 1), dtype=jnp.float32)
  params = init_params(kp, DIN, H, output_dim=1)
  packed = pack_params(params)

  out = jax.jit(salstm4_forward)(x, eps, packed)
  jax.block_until_ready(out)
  assert out.shape == (B, 1)
  print("KERNEL_OK")
</pallas_src>

<mosaic_0001>
module attributes {stable_mosaic.version = 11 : i64} {
  func.func @salstm4_kernel(%arg0: memref<16x4xf32, #tpu.memory_space<vmem>>, %arg1: memref<2x1xf32, #tpu.memory_space<vmem>>, %arg2: memref<4x128xf32, #tpu.memory_space<vmem>>, %arg3: memref<32x128xf32, #tpu.memory_space<vmem>>, %arg4: memref<160x32xf32, #tpu.memory_space<vmem>>, %arg5: memref<6x128xf32, #tpu.memory_space<vmem>>, %arg6: memref<2x1xf32, #tpu.memory_space<vmem>>) attributes {dimension_semantics = [], scalar_prefetch = 0 : i64, scratch_operands = 0 : i64, tpu.core_type = #tpu.core_type<tc>} {
    %c0 = arith.constant 0 : index
    %c0_0 = arith.constant 0 : index
    %0 = vector.load %arg5[%c0, %c0_0] : memref<6x128xf32, #tpu.memory_space<vmem>>, vector<6x128xf32>
    %1 = vector.extract_strided_slice %0 {offsets = [0, 0], sizes = [1, 128], strides = [1, 1]} : vector<6x128xf32> to vector<1x128xf32>
    %2 = vector.extract_strided_slice %0 {offsets = [1, 0], sizes = [1, 32], strides = [1, 1]} : vector<6x128xf32> to vector<1x32xf32>
    %3 = vector.extract_strided_slice %0 {offsets = [2, 0], sizes = [1, 32], strides = [1, 1]} : vector<6x128xf32> to vector<1x32xf32>
    %4 = vector.extract_strided_slice %0 {offsets = [3, 0], sizes = [1, 32], strides = [1, 1]} : vector<6x128xf32> to vector<1x32xf32>
    %5 = vector.extract_strided_slice %0 {offsets = [4, 0], sizes = [1, 2], strides = [1, 1]} : vector<6x128xf32> to vector<1x2xf32>
    %6 = vector.extract_strided_slice %0 {offsets = [4, 2], sizes = [1, 1], strides = [1, 1]} : vector<6x128xf32> to vector<1x1xf32>
    %7 = vector.extract_strided_slice %0 {offsets = [5, 0], sizes = [1, 17], strides = [1, 1]} : vector<6x128xf32> to vector<1x17xf32>
    %c0_1 = arith.constant 0 : index
    %c0_2 = arith.constant 0 : index
    %8 = vector.load %arg0[%c0_1, %c0_2] : memref<16x4xf32, #tpu.memory_space<vmem>>, vector<16x4xf32>
    %9 = tpu.iota {dimensions = array<i32: 0>} : vector<16x4xi32>
    %c2_i32 = arith.constant 2 : i32
    %c0_i32 = arith.constant 0 : i32
    %10 = arith.cmpi eq, %c2_i32, %c0_i32 : i32
    %c1_i32 = arith.constant 1 : i32
    %11 = arith.select %10, %c1_i32, %c2_i32 : i32
    %12 = vector.broadcast %11 : i32 to vector<16x4xi32>
    %13 = arith.remsi %9, %12 : vector<16x4xi32>
    %c0_i32_3 = arith.constant 0 : i32
    %14 = vector.broadcast %c0_i32_3 : i32 to vector<16x4xi32>
    %15 = arith.cmpi ne, %13, %14 : vector<16x4xi32>
    %c0_i32_4 = arith.constant 0 : i32
    %16 = vector.broadcast %c0_i32_4 : i32 to vector<16x4xi32>
    %17 = arith.cmpi slt, %13, %16 : vector<16x4xi32>
    %c0_i32_5 = arith.constant 0 : i32
    %18 = arith.cmpi slt, %11, %c0_i32_5 : i32
    %19 = vector.broadcast %18 : i1 to vector<16x4xi1>
    %20 = vector.broadcast %19 : vector<16x4xi1> to vector<16x4xi1>
    %21 = arith.xori %17, %20 : vector<16x4xi1>
    %22 = arith.andi %21, %15 : vector<16x4xi1>
    %23 = vector.broadcast %11 : i32 to vector<16x4xi32>
    %24 = arith.addi %13, %23 : vector<16x4xi32>
    %25 = arith.select %22, %24, %13 : vector<16x4xi1>, vector<16x4xi32>
    %c0_i32_6 = arith.constant 0 : i32
    %26 = vector.broadcast %c0_i32_6 : i32 to vector<16x4xi32>
    %27 = arith.cmpi eq, %25, %26 : vector<16x4xi32>
    %28 = math.absf %8 : vector<16x4xf32>
    %cst = arith.constant 0.000000e+00 : f32
    %29 = vector.broadcast %cst : f32 to vector<16x4xf32>
    %30 = arith.select %27, %28, %29 : vector<16x4xi1>, vector<16x4xf32>
    %cst_7 = arith.constant dense<0xFF800000> : vector<4xf32>
    %31 = vector.multi_reduction <maximumf>, %30, %cst_7 [0] : vector<16x4xf32> to vector<4xf32>
    %32 = vector.shape_cast %31 : vector<4xf32> to vector<1x4xf32>
    %33 = vector.extract_strided_slice %32 {offsets = [0, 0], sizes = [1, 1], strides = [1, 1]} : vector<1x4xf32> to vector<1x1xf32>
    %34 = tpu.iota {dimensions = array<i32: 1>} : vector<1x4xi32>
    %c2_i32_8 = arith.constant 2 : i32
    %35 = vector.broadcast %c2_i32_8 : i32 to vector<1x4xi32>
    %36 = arith.cmpi slt, %34, %35 : vector<1x4xi32>
    %cst_9 = arith.constant 9.99999997E-7 : f32
    %37 = vector.broadcast %cst_9 : f32 to vector<1x4xf32>
    %38 = arith.addf %32, %37 : vector<1x4xf32>
    %39 = tpu.reciprocal %38 {approx = true} : vector<1x4xf32> -> vector<1x4xf32>
    %cst_10 = arith.constant 1.000000e+00 : f32
    %40 = vector.broadcast %cst_10 : f32 to vector<1x4xf32>
    %41 = arith.select %36, %39, %40 : vector<1x4xi1>, vector<1x4xf32>
    %42 = vector.broadcast %41 : vector<1x4xf32> to vector<16x4xf32>
    %43 = arith.mulf %8, %42 : vector<16x4xf32>
    %c0_11 = arith.constant 0 : index
    %c0_12 = arith.constant 0 : index
    %44 = vector.load %arg2[%c0_11, %c0_12] : memref<4x128xf32, #tpu.memory_space<vmem>>, vector<4x128xf32>
    %cst_13 = arith.constant dense<0.000000e+00> : vector<16x128xf32>
    %45 = tpu.matmul %43, %44, %cst_13 {dimension_numbers = #tpu.dot_dimension_numbers<[1], [0], [0], [1], [0, 0, 1, 1], [], []>} : vector<16x4xf32>, vector<4x128xf32>, vector<16x128xf32> -> vector<16x128xf32>
    %46 = vector.broadcast %1 : vector<1x128xf32> to vector<16x128xf32>
    %47 = arith.addf %45, %46 : vector<16x128xf32>
    %c0_14 = arith.constant 0 : index
    %c0_15 = arith.constant 0 : index
    %48 = vector.load %arg3[%c0_14, %c0_15] : memref<32x128xf32, #tpu.memory_space<vmem>>, vector<32x128xf32>
    %cst_16 = arith.constant 0.000000e+00 : f32
    %49 = vector.broadcast %cst_16 : f32 to vector<2x32xf32>
    %cst_17 = arith.constant 0.000000e+00 : f32
    %50 = vector.broadcast %cst_17 : f32 to vector<2x32xf32>
    %cst_18 = arith.constant 0.000000e+00 : f32
    %51 = vector.broadcast %cst_18 : f32 to vector<2x1xf32>
    %cst_19 = arith.constant 0.000000e+00 : f32
    %52 = vector.broadcast %cst_19 : f32 to vector<2x32xf32>
    %53 = vector.extract_strided_slice %47 {offsets = [0, 0], sizes = [2, 128], strides = [1, 1]} : vector<16x128xf32> to vector<2x128xf32>
    %cst_20 = arith.constant dense<0.000000e+00> : vector<2x128xf32>
    %54 = tpu.matmul %49, %48, %cst_20 {dimension_numbers = #tpu.dot_dimension_numbers<[1], [0], [0], [1], [0, 0, 1, 1], [], []>} : vector<2x32xf32>, vector<32x128xf32>, vector<2x128xf32> -> vector<2x128xf32>
    %55 = arith.addf %53, %54 : vector<2x128xf32>
    %56 = arith.negf %55 : vector<2x128xf32>
    %57 = math.exp %56 : vector<2x128xf32>
    %cst_21 = arith.constant 1.000000e+00 : f32
    %58 = vector.broadcast %cst_21 : f32 to vector<2x128xf32>
    %59 = arith.addf %58, %57 : vector<2x128xf32>
    %60 = arith.divf %58, %59 : vector<2x128xf32>
    %61 = math.tanh %55 : vector<2x128xf32>
    %62 = vector.extract_strided_slice %60 {offsets = [0, 32], sizes = [2, 32], strides = [1, 1]} : vector<2x128xf32> to vector<2x32xf32>
    %63 = arith.mulf %62, %50 : vector<2x32xf32>
    %64 = vector.extract_strided_slice %60 {offsets = [0, 0], sizes = [2, 32], strides = [1, 1]} : vector<2x128xf32> to vector<2x32xf32>
    %65 = vector.extract_strided_slice %61 {offsets = [0, 64], sizes = [2, 32], strides = [1, 1]} : vector<2x128xf32> to vector<2x32xf32>
    %66 = arith.mulf %64, %65 : vector<2x32xf32>
    %67 = arith.addf %63, %66 : vector<2x32xf32>
    %68 = vector.extract_strided_slice %60 {offsets = [0, 96], sizes = [2, 32], strides = [1, 1]} : vector<2x128xf32> to vector<2x32xf32>
    %69 = math.tanh %67 : vector<2x32xf32>
    %70 = arith.mulf %68, %69 : vector<2x32xf32>
    %71 = vector.broadcast %2 : vector<1x32xf32> to vector<2x32xf32>
    %72 = arith.mulf %70, %71 : vector<2x32xf32>
    %cst_22 = arith.constant dense<0.000000e+00> : vector<2xf32>
    %73 = vector.multi_reduction <add>, %72, %cst_22 [1] : vector<2x32xf32> to vector<2xf32>
    %74 = vector.shape_cast %73 : vector<2xf32> to vector<2x1xf32>
    %75 = math.tanh %74 : vector<2x1xf32>
    %76 = math.exp %75 : vector<2x1xf32>
    %77 = arith.addf %51, %76 : vector<2x1xf32>
    %78 = vector.broadcast %76 : vector<2x1xf32> to vector<2x32xf32>
    %79 = arith.mulf %78, %70 : vector<2x32xf32>
    %80 = arith.addf %52, %79 : vector<2x32xf32>
    %81 = vector.extract_strided_slice %47 {offsets = [2, 0], sizes = [2, 128], strides = [1, 1]} : vector<16x128xf32> to vector<2x128xf32>
    %cst_23 = arith.constant dense<0.000000e+00> : vector<2x128xf32>
    %82 = tpu.matmul %70, %48, %cst_23 {dimension_numbers = #tpu.dot_dimension_numbers<[1], [0], [0], [1], [0, 0, 1, 1], [], []>} : vector<2x32xf32>, vector<32x128xf32>, vector<2x128xf32> -> vector<2x128xf32>
    %83 = arith.addf %81, %82 : vector<2x128xf32>
    %84 = arith.negf %83 : vector<2x128xf32>
    %85 = math.exp %84 : vector<2x128xf32>
    %cst_24 = arith.constant 1.000000e+00 : f32
    %86 = vector.broadcast %cst_24 : f32 to vector<2x128xf32>
    %87 = arith.addf %86, %85 : vector<2x128xf32>
    %88 = arith.divf %86, %87 : vector<2x128xf32>
    %89 = math.tanh %83 : vector<2x128xf32>
    %90 = vector.extract_strided_slice %88 {offsets = [0, 32], sizes = [2, 32], strides = [1, 1]} : vector<2x128xf32> to vector<2x32xf32>
    %91 = arith.mulf %90, %67 : vector<2x32xf32>
    %92 = vector.extract_strided_slice %88 {offsets = [0, 0], sizes = [2, 32], strides = [1, 1]} : vector<2x128xf32> to vector<2x32xf32>
    %93 = vector.extract_strided_slice %89 {offsets = [0, 64], sizes = [2, 32], strides = [1, 1]} : vector<2x128xf32> to vector<2x32xf32>
    %94 = arith.mulf %92, %93 : vector<2x32xf32>
    %95 = arith.addf %91, %94 : vector<2x32xf32>
    %96 = vector.extract_strided_slice %88 {offsets = [0, 96], sizes = [2, 32], strides = [1, 1]} : vector<2x128xf32> to vector<2x32xf32>
    %97 = math.tanh %95 : vector<2x32xf32>
    %98 = arith.mulf %96, %97 : vector<2x32xf32>
    %99 = vector.broadcast %2 : vector<1x32xf32> to vector<2x32xf32>
    %100 = arith.mulf %98, %99 : vector<2x32xf32>
    %cst_25 = arith.constant dense<0.000000e+00> : vector<2xf32>
    %101 = vector.multi_reduction <add>, %100, %cst_25 [1] : vector<2x32xf32> to vector<2xf32>
    %102 = vector.shape_cast %101 : vector<2xf32> to vector<2x1xf32>
    %103 = math.tanh %102 : vector<2x1xf32>
    %104 = math.exp %103 : vector<2x1xf32>
    %105 = arith.addf %77, %104 : vector<2x1xf32>
    %106 = vector.broadcast %104 : vector<2x1xf32> to vector<2x32xf32>
    %107 = arith.mulf %106, %98 : vector<2x32xf32>
    %108 = arith.addf %80, %107 : vector<2x32xf32>
    %109 = vector.extract_strided_slice %47 {offsets = [4, 0], sizes = [2, 128], strides = [1, 1]} : vector<16x128xf32> to vector<2x128xf32>
    %cst_26 = arith.constant dense<0.000000e+00> : vector<2x128xf32>
    %110 = tpu.matmul %98, %48, %cst_26 {dimension_numbers = #tpu.dot_dimension_numbers<[1], [0], [0], [1], [0, 0, 1, 1], [], []>} : vector<2x32xf32>, vector<32x128xf32>, vector<2x128xf32> -> vector<2x128xf32>
    %111 = arith.addf %109, %110 : vector<2x128xf32>
    %112 = arith.negf %111 : vector<2x128xf32>
    %113 = math.exp %112 : vector<2x128xf32>
    %cst_27 = arith.constant 1.000000e+00 : f32
    %114 = vector.broadcast %cst_27 : f32 to vector<2x128xf32>
    %115 = arith.addf %114, %113 : vector<2x128xf32>
    %116 = arith.divf %114, %115 : vector<2x128xf32>
    %117 = math.tanh %111 : vector<2x128xf32>
    %118 = vector.extract_strided_slice %116 {offsets = [0, 32], sizes = [2, 32], strides = [1, 1]} : vector<2x128xf32> to vector<2x32xf32>
    %119 = arith.mulf %118, %95 : vector<2x32xf32>
    %120 = vector.extract_strided_slice %116 {offsets = [0, 0], sizes = [2, 32], strides = [1, 1]} : vector<2x128xf32> to vector<2x32xf32>
    %121 = vector.extract_strided_slice %117 {offsets = [0, 64], sizes = [2, 32], strides = [1, 1]} : vector<2x128xf32> to vector<2x32xf32>
    %122 = arith.mulf %120, %121 : vector<2x32xf32>
    %123 = arith.addf %119, %122 : vector<2x32xf32>
    %124 = vector.extract_strided_slice %116 {offsets = [0, 96], sizes = [2, 32], strides = [1, 1]} : vector<2x128xf32> to vector<2x32xf32>
    %125 = math.tanh %123 : vector<2x32xf32>
    %126 = arith.mulf %124, %125 : vector<2x32xf32>
    %127 = vector.broadcast %2 : vector<1x32xf32> to vector<2x32xf32>
    %128 = arith.mulf %126, %127 : vector<2x32xf32>
    %cst_28 = arith.constant dense<0.000000e+00> : vector<2xf32>
    %129 = vector.multi_reduction <add>, %128, %cst_28 [1] : vector<2x32xf32> to vector<2xf32>
    %130 = vector.shape_cast %129 : vector<2xf32> to vector<2x1xf32>
    %131 = math.tanh %130 : vector<2x1xf32>
    %132 = math.exp %131 : vector<2x1xf32>
    %133 = arith.addf %105, %132 : vector<2x1xf32>
    %134 = vector.broadcast %132 : vector<2x1xf32> to vector<2x32xf32>
    %135 = arith.mulf %134, %126 : vector<2x32xf32>
    %136 = arith.addf %108, %135 : vector<2x32xf32>
    %137 = vector.extract_strided_slice %47 {offsets = [6, 0], sizes = [2, 128], strides = [1, 1]} : vector<16x128xf32> to vector<2x128xf32>
    %cst_29 = arith.constant dense<0.000000e+00> : vector<2x128xf32>
    %138 = tpu.matmul %126, %48, %cst_29 {dimension_numbers = #tpu.dot_dimension_numbers<[1], [0], [0], [1], [0, 0, 1, 1], [], []>} : vector<2x32xf32>, vector<32x128xf32>, vector<2x128xf32> -> vector<2x128xf32>
    %139 = arith.addf %137, %138 : vector<2x128xf32>
    %140 = arith.negf %139 : vector<2x128xf32>
    %141 = math.exp %140 : vector<2x128xf32>
    %cst_30 = arith.constant 1.000000e+00 : f32
    %142 = vector.broadcast %cst_30 : f32 to vector<2x128xf32>
    %143 = arith.addf %142, %141 : vector<2x128xf32>
    %144 = arith.divf %142, %143 : vector<2x128xf32>
    %145 = math.tanh %139 : vector<2x128xf32>
    %146 = vector.extract_strided_slice %144 {offsets = [0, 32], sizes = [2, 32], strides = [1, 1]} : vector<2x128xf32> to vector<2x32xf32>
    %147 = arith.mulf %146, %123 : vector<2x32xf32>
    %148 = vector.extract_strided_slice %144 {offsets = [0, 0], sizes = [2, 32], strides = [1, 1]} : vector<2x128xf32> to vector<2x32xf32>
    %149 = vector.extract_strided_slice %145 {offsets = [0, 64], sizes = [2, 32], strides = [1, 1]} : vector<2x128xf32> to vector<2x32xf32>
    %150 = arith.mulf %148, %149 : vector<2x32xf32>
    %151 = arith.addf %147, %150 : vector<2x32xf32>
    %152 = vector.extract_strided_slice %144 {offsets = [0, 96], sizes = [2, 32], strides = [1, 1]} : vector<2x128xf32> to vector<2x32xf32>
    %153 = math.tanh %151 : vector<2x32xf32>
    %154 = arith.mulf %152, %153 : vector<2x32xf32>
    %155 = vector.broadcast %2 : vector<1x32xf32> to vector<2x32xf32>
    %156 = arith.mulf %154, %155 : vector<2x32xf32>
    %cst_31 = arith.constant dense<0.000000e+00> : vector<2xf32>
    %157 = vector.multi_reduction <add>, %156, %cst_31 [1] : vector<2x32xf32> to vector<2xf32>
    %158 = vector.shape_cast %157 : vector<2xf32> to vector<2x1xf32>
    %159 = math.tanh %158 : vector<2x1xf32>
    %160 = math.exp %159 : vector<2x1xf32>
    %161 = arith.addf %133, %160 : vector<2x1xf32>
    %162 = vector.broadcast %160 : vector<2x1xf32> to vector<2x32xf32>
    %163 = arith.mulf %162, %154 : vector<2x32xf32>
    %164 = arith.addf %136, %163 : vector<2x32xf32>
    %165 = vector.extract_strided_slice %47 {offsets = [8, 0], sizes = [2, 128], strides = [1, 1]} : vector<16x128xf32> to vector<2x128xf32>
    %cst_32 = arith.constant dense<0.000000e+00> : vector<2x128xf32>
    %166 = tpu.matmul %154, %48, %cst_32 {dimension_numbers = #tpu.dot_dimension_numbers<[1], [0], [0], [1], [0, 0, 1, 1], [], []>} : vector<2x32xf32>, vector<32x128xf32>, vector<2x128xf32> -> vector<2x128xf32>
    %167 = arith.addf %165, %166 : vector<2x128xf32>
    %168 = arith.negf %167 : vector<2x128xf32>
    %169 = math.exp %168 : vector<2x128xf32>
    %cst_33 = arith.constant 1.000000e+00 : f32
    %170 = vector.broadcast %cst_33 : f32 to vector<2x128xf32>
    %171 = arith.addf %170, %169 : vector<2x128xf32>
    %172 = arith.divf %170, %171 : vector<2x128xf32>
    %173 = math.tanh %167 : vector<2x128xf32>
    %174 = vector.extract_strided_slice %172 {offsets = [0, 32], sizes = [2, 32], strides = [1, 1]} : vector<2x128xf32> to vector<2x32xf32>
    %175 = arith.mulf %174, %151 : vector<2x32xf32>
    %176 = vector.extract_strided_slice %172 {offsets = [0, 0], sizes = [2, 32], strides = [1, 1]} : vector<2x128xf32> to vector<2x32xf32>
    %177 = vector.extract_strided_slice %173 {offsets = [0, 64], sizes = [2, 32], strides = [1, 1]} : vector<2x128xf32> to vector<2x32xf32>
    %178 = arith.mulf %176, %177 : vector<2x32xf32>
    %179 = arith.addf %175, %178 : vector<2x32xf32>
    %180 = vector.extract_strided_slice %172 {offsets = [0, 96], sizes = [2, 32], strides = [1, 1]} : vector<2x128xf32> to vector<2x32xf32>
    %181 = math.tanh %179 : vector<2x32xf32>
    %182 = arith.mulf %180, %181 : vector<2x32xf32>
    %183 = vector.broadcast %2 : vector<1x32xf32> to vector<2x32xf32>
    %184 = arith.mulf %182, %183 : vector<2x32xf32>
    %cst_34 = arith.constant dense<0.000000e+00> : vector<2xf32>
    %185 = vector.multi_reduction <add>, %184, %cst_34 [1] : vector<2x32xf32> to vector<2xf32>
    %186 = vector.shape_cast %185 : vector<2xf32> to vector<2x1xf32>
    %187 = math.tanh %186 : vector<2x1xf32>
    %188 = math.exp %187 : vector<2x1xf32>
    %189 = arith.addf %161, %188 : vector<2x1xf32>
    %190 = vector.broadcast %188 : vector<2x1xf32> to vector<2x32xf32>
    %191 = arith.mulf %190, %182 : vector<2x32xf32>
    %192 = arith.addf %164, %191 : vector<2x32xf32>
    %193 = vector.extract_strided_slice %47 {offsets = [10, 0], sizes = [2, 128], strides = [1, 1]} : vector<16x128xf32> to vector<2x128xf32>
    %cst_35 = arith.constant dense<0.000000e+00> : vector<2x128xf32>
    %194 = tpu.matmul %182, %48, %cst_35 {dimension_numbers = #tpu.dot_dimension_numbers<[1], [0], [0], [1], [0, 0, 1, 1], [], []>} : vector<2x32xf32>, vector<32x128xf32>, vector<2x128xf32> -> vector<2x128xf32>
    %195 = arith.addf %193, %194 : vector<2x128xf32>
    %196 = arith.negf %195 : vector<2x128xf32>
    %197 = math.exp %196 : vector<2x128xf32>
    %cst_36 = arith.constant 1.000000e+00 : f32
    %198 = vector.broadcast %cst_36 : f32 to vector<2x128xf32>
    %199 = arith.addf %198, %197 : vector<2x128xf32>
    %200 = arith.divf %198, %199 : vector<2x128xf32>
    %201 = math.tanh %195 : vector<2x128xf32>
    %202 = vector.extract_strided_slice %200 {offsets = [0, 32], sizes = [2, 32], strides = [1, 1]} : vector<2x128xf32> to vector<2x32xf32>
    %203 = arith.mulf %202, %179 : vector<2x32xf32>
    %204 = vector.extract_strided_slice %200 {offsets = [0, 0], sizes = [2, 32], strides = [1, 1]} : vector<2x128xf32> to vector<2x32xf32>
    %205 = vector.extract_strided_slice %201 {offsets = [0, 64], sizes = [2, 32], strides = [1, 1]} : vector<2x128xf32> to vector<2x32xf32>
    %206 = arith.mulf %204, %205 : vector<2x32xf32>
    %207 = arith.addf %203, %206 : vector<2x32xf32>
    %208 = vector.extract_strided_slice %200 {offsets = [0, 96], sizes = [2, 32], strides = [1, 1]} : vector<2x128xf32> to vector<2x32xf32>
    %209 = math.tanh %207 : vector<2x32xf32>
    %210 = arith.mulf %208, %209 : vector<2x32xf32>
    %211 = vector.broadcast %2 : vector<1x32xf32> to vector<2x32xf32>
    %212 = arith.mulf %210, %211 : vector<2x32xf32>
    %cst_37 = arith.constant dense<0.000000e+00> : vector<2xf32>
    %213 = vector.multi_reduction <add>, %212, %cst_37 [1] : vector<2x32xf32> to vector<2xf32>
    %214 = vector.shape_cast %213 : vector<2xf32> to vector<2x1xf32>
    %215 = math.tanh %214 : vector<2x1xf32>
    %216 = math.exp %215 : vector<2x1xf32>
    %217 = arith.addf %189, %216 : vector<2x1xf32>
    %218 = vector.broadcast %216 : vector<2x1xf32> to vector<2x32xf32>
    %219 = arith.mulf %218, %210 : vector<2x32xf32>
    %220 = arith.addf %192, %219 : vector<2x32xf32>
    %221 = vector.extract_strided_slice %47 {offsets = [12, 0], sizes = [2, 128], strides = [1, 1]} : vector<16x128xf32> to vector<2x128xf32>
    %cst_38 = arith.constant dense<0.000000e+00> : vector<2x128xf32>
    %222 = tpu.matmul %210, %48, %cst_38 {dimension_numbers = #tpu.dot_dimension_numbers<[1], [0], [0], [1], [0, 0, 1, 1], [], []>} : vector<2x32xf32>, vector<32x128xf32>, vector<2x128xf32> -> vector<2x128xf32>
    %223 = arith.addf %221, %222 : vector<2x128xf32>
    %224 = arith.negf %223 : vector<2x128xf32>
    %225 = math.exp %224 : vector<2x128xf32>
    %cst_39 = arith.constant 1.000000e+00 : f32
    %226 = vector.broadcast %cst_39 : f32 to vector<2x128xf32>
    %227 = arith.addf %226, %225 : vector<2x128xf32>
    %228 = arith.divf %226, %227 : vector<2x128xf32>
    %229 = math.tanh %223 : vector<2x128xf32>
    %230 = vector.extract_strided_slice %228 {offsets = [0, 32], sizes = [2, 32], strides = [1, 1]} : vector<2x128xf32> to vector<2x32xf32>
    %231 = arith.mulf %230, %207 : vector<2x32xf32>
    %232 = vector.extract_strided_slice %228 {offsets = [0, 0], sizes = [2, 32], strides = [1, 1]} : vector<2x128xf32> to vector<2x32xf32>
    %233 = vector.extract_strided_slice %229 {offsets = [0, 64], sizes = [2, 32], strides = [1, 1]} : vector<2x128xf32> to vector<2x32xf32>
    %234 = arith.mulf %232, %233 : vector<2x32xf32>
    %235 = arith.addf %231, %234 : vector<2x32xf32>
    %236 = vector.extract_strided_slice %228 {offsets = [0, 96], sizes = [2, 32], strides = [1, 1]} : vector<2x128xf32> to vector<2x32xf32>
    %237 = math.tanh %235 : vector<2x32xf32>
    %238 = arith.mulf %236, %237 : vector<2x32xf32>
    %239 = vector.broadcast %2 : vector<1x32xf32> to vector<2x32xf32>
    %240 = arith.mulf %238, %239 : vector<2x32xf32>
    %cst_40 = arith.constant dense<0.000000e+00> : vector<2xf32>
    %241 = vector.multi_reduction <add>, %240, %cst_40 [1] : vector<2x32xf32> to vector<2xf32>
    %242 = vector.shape_cast %241 : vector<2xf32> to vector<2x1xf32>
    %243 = math.tanh %242 : vector<2x1xf32>
    %244 = math.exp %243 : vector<2x1xf32>
    %245 = arith.addf %217, %244 : vector<2x1xf32>
    %246 = vector.broadcast %244 : vector<2x1xf32> to vector<2x32xf32>
    %247 = arith.mulf %246, %238 : vector<2x32xf32>
    %248 = arith.addf %220, %247 : vector<2x32xf32>
    %249 = vector.extract_strided_slice %47 {offsets = [14, 0], sizes = [2, 128], strides = [1, 1]} : vector<16x128xf32> to vector<2x128xf32>
    %cst_41 = arith.constant dense<0.000000e+00> : vector<2x128xf32>
    %250 = tpu.matmul %238, %48, %cst_41 {dimension_numbers = #tpu.dot_dimension_numbers<[1], [0], [0], [1], [0, 0, 1, 1], [], []>} : vector<2x32xf32>, vector<32x128xf32>, vector<2x128xf32> -> vector<2x128xf32>
    %251 = arith.addf %249, %250 : vector<2x128xf32>
    %252 = arith.negf %251 : vector<2x128xf32>
    %253 = math.exp %252 : vector<2x128xf32>
    %cst_42 = arith.constant 1.000000e+00 : f32
    %254 = vector.broadcast %cst_42 : f32 to vector<2x128xf32>
    %255 = arith.addf %254, %253 : vector<2x128xf32>
    %256 = arith.divf %254, %255 : vector<2x128xf32>
    %257 = math.tanh %251 : vector<2x128xf32>
    %258 = vector.extract_strided_slice %256 {offsets = [0, 32], sizes = [2, 32], strides = [1, 1]} : vector<2x128xf32> to vector<2x32xf32>
    %259 = arith.mulf %258, %235 : vector<2x32xf32>
    %260 = vector.extract_strided_slice %256 {offsets = [0, 0], sizes = [2, 32], strides = [1, 1]} : vector<2x128xf32> to vector<2x32xf32>
    %261 = vector.extract_strided_slice %257 {offsets = [0, 64], sizes = [2, 32], strides = [1, 1]} : vector<2x128xf32> to vector<2x32xf32>
    %262 = arith.mulf %260, %261 : vector<2x32xf32>
    %263 = arith.addf %259, %262 : vector<2x32xf32>
    %264 = vector.extract_strided_slice %256 {offsets = [0, 96], sizes = [2, 32], strides = [1, 1]} : vector<2x128xf32> to vector<2x32xf32>
    %265 = math.tanh %263 : vector<2x32xf32>
    %266 = arith.mulf %264, %265 : vector<2x32xf32>
    %267 = vector.broadcast %2 : vector<1x32xf32> to vector<2x32xf32>
    %268 = arith.mulf %266, %267 : vector<2x32xf32>
    %cst_43 = arith.constant dense<0.000000e+00> : vector<2xf32>
    %269 = vector.multi_reduction <add>, %268, %cst_43 [1] : vector<2x32xf32> to vector<2xf32>
    %270 = vector.shape_cast %269 : vector<2xf32> to vector<2x1xf32>
    %271 = math.tanh %270 : vector<2x1xf32>
    %272 = math.exp %271 : vector<2x1xf32>
    %273 = arith.addf %245, %272 : vector<2x1xf32>
    %274 = vector.broadcast %272 : vector<2x1xf32> to vector<2x32xf32>
    %275 = arith.mulf %274, %266 : vector<2x32xf32>
    %276 = arith.addf %248, %275 : vector<2x32xf32>
    %277 = tpu.reciprocal %273 {approx = true} : vector<2x1xf32> -> vector<2x1xf32>
    %278 = vector.broadcast %277 : vector<2x1xf32> to vector<2x32xf32>
    %279 = arith.mulf %276, %278 : vector<2x32xf32>
    %cst_44 = arith.constant 0.000000e+00 : f32
    %280 = vector.broadcast %cst_44 : f32 to vector<2x32xf32>
    %281 = arith.maximumf %279, %280 : vector<2x32xf32>
    %c0_45 = arith.constant 0 : index
    %c0_46 = arith.constant 0 : index
    %282 = vector.load %arg4[%c0_45, %c0_46] : memref<160x32xf32, #tpu.memory_space<vmem>>, vector<32x32xf32>
    %c32 = arith.constant 32 : index
    %c0_47 = arith.constant 0 : index
    %283 = vector.load %arg4[%c32, %c0_47] : memref<160x32xf32, #tpu.memory_space<vmem>>, vector<32x32xf32>
    %c64 = arith.constant 64 : index
    %c0_48 = arith.constant 0 : index
    %284 = vector.load %arg4[%c64, %c0_48] : memref<160x32xf32, #tpu.memory_space<vmem>>, vector<32x32xf32>
    %285 = vector.extract_strided_slice %284 {offsets = [0, 0], sizes = [32, 2], strides = [1, 1]} : vector<32x32xf32> to vector<32x2xf32>
    %c96 = arith.constant 96 : index
    %c0_49 = arith.constant 0 : index
    %286 = vector.load %arg4[%c96, %c0_49] : memref<160x32xf32, #tpu.memory_space<vmem>>, vector<34x32xf32>
    %287 = vector.extract_strided_slice %286 {offsets = [0, 0], sizes = [34, 17], strides = [1, 1]} : vector<34x32xf32> to vector<34x17xf32>
    %c136 = arith.constant 136 : index
    %c0_50 = arith.constant 0 : index
    %288 = vector.load %arg4[%c136, %c0_50] : memref<160x32xf32, #tpu.memory_space<vmem>>, vector<17x32xf32>
    %289 = vector.extract_strided_slice %288 {offsets = [0, 0], sizes = [17, 1], strides = [1, 1]} : vector<17x32xf32> to vector<17x1xf32>
    %cst_51 = arith.constant dense<0.000000e+00> : vector<2x32xf32>
    %290 = tpu.matmul %281, %282, %cst_51 {dimension_numbers = #tpu.dot_dimension_numbers<[1], [0], [0], [1], [0, 0, 1, 1], [], []>} : vector<2x32xf32>, vector<32x32xf32>, vector<2x32xf32> -> vector<2x32xf32>
    %291 = vector.broadcast %3 : vector<1x32xf32> to vector<2x32xf32>
    %292 = arith.addf %290, %291 : vector<2x32xf32>
    %cst_52 = arith.constant 0.000000e+00 : f32
    %293 = vector.broadcast %cst_52 : f32 to vector<2x32xf32>
    %294 = arith.maximumf %292, %293 : vector<2x32xf32>
    %cst_53 = arith.constant dense<0.000000e+00> : vector<2x32xf32>
    %295 = tpu.matmul %294, %283, %cst_53 {dimension_numbers = #tpu.dot_dimension_numbers<[1], [0], [0], [1], [0, 0, 1, 1], [], []>} : vector<2x32xf32>, vector<32x32xf32>, vector<2x32xf32> -> vector<2x32xf32>
    %296 = vector.broadcast %4 : vector<1x32xf32> to vector<2x32xf32>
    %297 = arith.addf %295, %296 : vector<2x32xf32>
    %298 = math.tanh %297 : vector<2x32xf32>
    %cst_54 = arith.constant dense<0.000000e+00> : vector<2x2xf32>
    %299 = tpu.matmul %298, %285, %cst_54 {dimension_numbers = #tpu.dot_dimension_numbers<[1], [0], [0], [1], [0, 0, 1, 1], [], []>} : vector<2x32xf32>, vector<32x2xf32>, vector<2x2xf32> -> vector<2x2xf32>
    %300 = vector.broadcast %5 : vector<1x2xf32> to vector<2x2xf32>
    %301 = arith.addf %299, %300 : vector<2x2xf32>
    %302 = vector.extract_strided_slice %301 {offsets = [0, 0], sizes = [2, 1], strides = [1, 1]} : vector<2x2xf32> to vector<2x1xf32>
    %303 = vector.extract_strided_slice %301 {offsets = [0, 1], sizes = [2, 1], strides = [1, 1]} : vector<2x2xf32> to vector<2x1xf32>
    %304 = math.exp %303 : vector<2x1xf32>
    %305 = tpu.concatenate %281, %302, %304 in 1 : vector<2x32xf32>, vector<2x1xf32>, vector<2x1xf32> -> vector<2x34xf32>
    %cst_55 = arith.constant dense<0.000000e+00> : vector<2x17xf32>
    %306 = tpu.matmul %305, %287, %cst_55 {dimension_numbers = #tpu.dot_dimension_numbers<[1], [0], [0], [1], [0, 0, 1, 1], [], []>} : vector<2x34xf32>, vector<34x17xf32>, vector<2x17xf32> -> vector<2x17xf32>
    %307 = vector.broadcast %7 : vector<1x17xf32> to vector<2x17xf32>
    %308 = arith.addf %306, %307 : vector<2x17xf32>
    %309 = math.tanh %308 : vector<2x17xf32>
    %cst_56 = arith.constant dense<0.000000e+00> : vector<2x1xf32>
    %310 = tpu.matmul %309, %289, %cst_56 {dimension_numbers = #tpu.dot_dimension_numbers<[1], [0], [0], [1], [0, 0, 1, 1], [], []>} : vector<2x17xf32>, vector<17x1xf32>, vector<2x1xf32> -> vector<2x1xf32>
    %311 = vector.broadcast %6 : vector<1x1xf32> to vector<2x1xf32>
    %312 = arith.addf %310, %311 : vector<2x1xf32>
    %cst_57 = arith.constant 2.500000e-01 : f32
    %313 = vector.broadcast %cst_57 : f32 to vector<2x1xf32>
    %314 = arith.mulf %312, %313 : vector<2x1xf32>
    %315 = math.exp %314 : vector<2x1xf32>
    %c0_58 = arith.constant 0 : index
    %c0_59 = arith.constant 0 : index
    %316 = vector.load %arg1[%c0_58, %c0_59] : memref<2x1xf32, #tpu.memory_space<vmem>>, vector<2x1xf32>
    %317 = arith.mulf %316, %304 : vector<2x1xf32>
    %318 = arith.addf %317, %302 : vector<2x1xf32>
    %319 = math.tanh %318 : vector<2x1xf32>
    %cst_60 = arith.constant 1.000000e+00 : f32
    %320 = vector.broadcast %cst_60 : f32 to vector<2x1xf32>
    %321 = arith.addf %320, %315 : vector<2x1xf32>
    %322 = arith.mulf %319, %321 : vector<2x1xf32>
    %cst_61 = arith.constant 1.000000e+00 : f32
    %323 = vector.broadcast %cst_61 : f32 to vector<2x1xf32>
    %324 = arith.addf %323, %315 : vector<2x1xf32>
    %325 = arith.mulf %322, %324 : vector<2x1xf32>
    %326 = vector.broadcast %33 : vector<1x1xf32> to vector<2x1xf32>
    %327 = arith.mulf %325, %326 : vector<2x1xf32>
    %c0_62 = arith.constant 0 : index
    %c0_63 = arith.constant 0 : index
    %328 = vector.load %arg6[%c0_62, %c0_63] : memref<2x1xf32, #tpu.memory_space<vmem>>, vector<2x1xf32>
    tpu.vector_store %arg6[%c0_62, %c0_63], %327 {strides = array<i32>} : memref<2x1xf32, #tpu.memory_space<vmem>>, vector<2x1xf32>,
    return
  }
}

</mosaic_0001>

<llo_original>
// kernel: salstm4_forward.1
$region0: #{salstm4_forward.1}
  #allocation0 [shape = 'u32[]', space=smem, size = 0x4, offset = 0x4, fixed_abs, tag = 'smem constant byte address 0x4 - core index']
  #allocation1 [shape = 'u32[144,128]{1,0:T(1,128)}', space=vmem, size = 0x12000, scoped, tag = 'internal scratch']
  %s0 = inlined_call_operand.vmem [shape: f32[16,4], index: 0, kind: input, shape index: {}]
  %s1 = inlined_call_operand.vmem [shape: f32[2,1], index: 1, kind: input, shape index: {}]
  %s2 = inlined_call_operand.vmem [shape: f32[4,128], index: 2, kind: input, shape index: {}]
  %s3 = inlined_call_operand.vmem [shape: f32[32,128], index: 3, kind: input, shape index: {}]
  %s4 = inlined_call_operand.vmem [shape: f32[160,32], index: 4, kind: input, shape index: {}]
  %s5 = inlined_call_operand.vmem [shape: f32[6,128], index: 5, kind: input, shape index: {}]
  %s6 = inlined_call_operand.vmem [shape: f32[2,1], index: 6, kind: output, shape index: {}]
  %s7 = sld [smem:[#allocation0]]
  $region34: #{salstm4_forward.1} parent=0
    _
  %s9 = ssub.s32 1, %s7
  %s10 = scalar_select 0, %s9, %s7
  // Predicated region
  $region2: #{salstm4_forward.1} parent=0 // pred_check
    _
  $region3: #{salstm4_forward.1} parent=0 // pred_check_branch
    %12 = sbr.rel (0) target = $region5
  $region4: #{salstm4_forward.1} parent=0 // pred_region
    _
  $region5: #{salstm4_forward.1} parent=0 // pred_fallthru
    _
  // Predicated region
  $region6: #{salstm4_forward.1} parent=0 // pred_check
    _
  $region7: #{salstm4_forward.1} parent=0 // pred_check_branch
    %14 = sbr.rel (0) target = $region9
  $region8: #{salstm4_forward.1} parent=0 // pred_region
    _
  $region9: #{salstm4_forward.1} parent=0 // pred_fallthru
    _
  // Predicated region
  $region10: #{salstm4_forward.1} parent=0 // pred_check
    _
  $region11: #{salstm4_forward.1} parent=0 // pred_check_branch
    %16 = sbr.rel (0) target = $region13
  $region12: #{salstm4_forward.1} parent=0 // pred_region
    _
  $region13: #{salstm4_forward.1} parent=0 // pred_fallthru
    _
  // Predicated region
  $region14: #{salstm4_forward.1} parent=0 // pred_check
    _
  $region15: #{salstm4_forward.1} parent=0 // pred_check_branch
    %18 = sbr.rel (0) target = $region17
  $region16: #{salstm4_forward.1} parent=0 // pred_region
    _
  $region17: #{salstm4_forward.1} parent=0 // pred_fallthru
    _
  // Predicated region
  $region18: #{salstm4_forward.1} parent=0 // pred_check
    _
  $region19: #{salstm4_forward.1} parent=0 // pred_check_branch
    %20 = sbr.rel (0) target = $region21
  $region20: #{salstm4_forward.1} parent=0 // pred_region
    _
  $region21: #{salstm4_forward.1} parent=0 // pred_fallthru
    _
  // Predicated region
  $region22: #{salstm4_forward.1} parent=0 // pred_check
    _
  $region23: #{salstm4_forward.1} parent=0 // pred_check_branch
    %22 = sbr.rel (0) target = $region25
  $region24: #{salstm4_forward.1} parent=0 // pred_region
    _
  $region25: #{salstm4_forward.1} parent=0 // pred_fallthru
    _
  %v23 = vld [vmem:[%s5] sm:$0x3f]
  %v24 = vld [vmem:[%s0] sm:$0xff]
  %v25 = vld [vmem:[%s0 + $0x8] sm:$0xff]
  %v26 = vlaneseq
  %v27 = vshrl.u32 %v26, 7
  %v28 = vadd.s32 %v27, 8
  %vm29 = vcmp.lt.s32.totalorder %v27, 0
  %v30 = vsub.s32 0, %v27
  %v31 = vsel %vm29, %v30, %v27
  %v32 = vshrl.u32 %v31, 1
  %v33 = vand.u32 %v31, 1
  %v34 = vsub.s32 0, %v33
  %v35 = vsel %vm29, %v34, %v33
  %vm36 = vcmp.lt.s32.totalorder %v28, 0
  %v37 = vsub.s32 0, %v28
  %v38 = vsel %vm36, %v37, %v28
  %v39 = vshrl.u32 %v38, 1
  %v40 = vand.u32 %v38, 1
  %v41 = vsub.s32 0, %v40
  %v42 = vsel %vm36, %v41, %v40
  %vm43 = vcmp.ne.s32.totalorder %v35, 0
  %vm44 = vcmp.ne.s32.totalorder %v42, 0
  %vm45 = vcmp.lt.s32.totalorder %v35, 0
  %vm46 = vcmp.lt.s32.totalorder %v42, 0
  %vm47 = vmand %vm45, %vm43
  %vm48 = vmand %vm46, %vm44
  %v49 = vadd.s32 %v35, 2
  %v50 = vadd.s32 %v42, 2
  %v51 = vsel %vm47, %v49, %v35
  %v52 = vsel %vm48, %v50, %v42
  %vm53 = vcmp.eq.s32.totalorder %v51, 0
  %vm54 = vcmp.eq.s32.totalorder %v52, 0
  %v55 = vand.u32 2147483647, %v24
  %v56 = vand.u32 2147483647, %v25
  %v57 = vsel %vm53, %v55, 0.0
  %v58 = vsel %vm54, %v56, 0.0
  %vm59 = vcmask 31744
  %v60 = vsel %vm59, %v57, -inf
  %v61 = vsel %vm59, %v58, -inf
  %v62 = vmax.f32 %v60, %v61
  %v63 = vrot.slane %v62, 4
  %v64 = vmax.f32 %v62, %v63
  %v65 = vrot.slane %v64, 2
  %v66 = vmax.f32 %v64, %v65
  %v67 = vrot.slane %v66, 1
  %v68 = vmax.f32 %v66, %v67
  %v69 = vlaneseq
  %v70 = vand.u32 %v69, 127
  %vm71 = vcmp.lt.s32.totalorder %v70, 2
  %v72 = vadd.f32 %v68, 1e-06
  %v73 = vrcp.pop %v72
  %v74 = vsel %vm71, %v73, 1.0
  %v75 = vmul.f32 %v24, %v74
  %v76 = vmul.f32 %v25, %v74
  %v77 = vld [vmem:[%s2] sm:$0xf]
  %v78 = vlaneseq
  %v79 = vshrl.u32 %v78, 7
  %v80 = vsub.s32 0, %v79
  %v81 = vrot.slane %v23, %v80
  %v83 = vsel %vm59, %v75, 0
  %v86 = vsel %vm59, %v76, 0
  %vm88 = vcmask 1043456
  %v90 = vsel %vm88, %v77, 0
  %92 = vmatprep.subr.mxu0 0.0
  %93 = vmatpush1.msra.mxu0 %v90
  %94 = vmatprep.subr.mxu0 0.0
  %95 = vmatpush1.msra.mxu0 0.0
  %96 = vmatprep.subr.mxu0 0.0
  %97 = vmatpush1.msra.mxu0 0.0
  %98 = vmatprep.subr.mxu0 0.0
  %99 = vmatpush1.msra.mxu0 0.0
  %100 = vmatprep.subr.mxu0 0.0
  %101 = vmatpush1.msra.mxu0 0.0
  %102 = vmatprep.subr.mxu0 0.0
  %103 = vmatpush1.msra.mxu0 0.0
  %104 = vmatprep.subr.mxu0 0.0
  %105 = vmatpush1.msra.mxu0 0.0
  %106 = vmatprep.subr.mxu0 0.0
  %107 = vmatpush1.msra.mxu0 0.0
  %108 = vmatprep.subr.mxu0 0.0
  %109 = vmatpush1.msra.mxu0 0.0
  %110 = vmatprep.subr.mxu0 0.0
  %111 = vmatpush1.msra.mxu0 0.0
  %112 = vmatprep.subr.mxu0 0.0
  %113 = vmatpush1.msra.mxu0 0.0
  %114 = vmatprep.subr.mxu0 0.0
  %115 = vmatpush1.msra.mxu0 0.0
  %116 = vmatprep.subr.mxu0 0.0
  %117 = vmatpush1.msra.mxu0 0.0
  %118 = vmatprep.subr.mxu0 0.0
  %119 = vmatpush1.msra.mxu0 0.0
  %120 = vmatprep.subr.mxu0 0.0
  %121 = vmatpush1.msra.mxu0 0.0
  %122 = vmatprep.subr.mxu0 0.0
  %123 = vmatpush1.msra.mxu0 0.0
  %124 = vmatprep.subr.mxu0 0.0
  %125 = vmatpush1.msra.mxu0 0.0
  %126 = vmatprep.subr.mxu0 0.0
  %127 = vmatpush1.msra.mxu0 0.0
  %128 = vmatprep.subr.mxu0 0.0
  %129 = vmatpush1.msra.mxu0 0.0
  %130 = vmatprep.subr.mxu0 0.0
  %131 = vmatpush1.msra.mxu0 0.0
  %132 = vmatprep.subr.mxu0 0.0
  %133 = vmatpush1.msra.mxu0 0.0
  %134 = vmatprep.subr.mxu0 0.0
  %135 = vmatpush1.msra.mxu0 0.0
  %136 = vmatprep.subr.mxu0 0.0
  %137 = vmatpush1.msra.mxu0 0.0
  %138 = vmatprep.subr.mxu0 0.0
  %139 = vmatpush1.msra.mxu0 0.0
  %140 = vmatprep.subr.mxu0 0.0
  %141 = vmatpush1.msra.mxu0 0.0
  %142 = vmatprep.subr.mxu0 0.0
  %143 = vmatpush1.msra.mxu0 0.0
  %144 = vmatprep.subr.mxu0 0.0
  %145 = vmatpush1.msra.mxu0 0.0
  %146 = vmatprep.subr.mxu0 0.0
  %147 = vmatpush1.msra.mxu0 0.0
  %148 = vmatprep.subr.mxu0 0.0
  %149 = vmatpush1.msra.mxu0 0.0
  %150 = vmatprep.subr.mxu0 0.0
  %151 = vmatpush1.msra.mxu0 0.0
  %152 = vmatprep.subr.mxu0 0.0
  %153 = vmatpush1.msra.mxu0 0.0
  %154 = vmatprep.subr.mxu0 0.0
  %155 = vmatpush1.msra.mxu0 0.0
  %156 = vmatprep.mubr.f32.mxu0 0.0
  %157 = vmatmul.mubr.f32.gmra.mrb[0].mxu0 %v83
  %v158 = vpop.f32.mrb[0].mxu0
  %v159 = vadd.f32 %v81, %v158
  %v160 = vpop.f32.mrb[0].mxu0
  %161 = vmatprep.mubr.f32.mxu0 0.0
  %162 = vmatmul.mubr.f32.gmra.mrb[0].mxu0 %v86
  %v163 = vpop.f32.mrb[0].mxu0
  %v164 = vadd.f32 %v81, %v163
  %v165 = vpop.f32.mrb[0].mxu0
  %166 = vdwg.mxu0
  %v167 = vld [vmem:[%s3] sm:$0xff]
  %v168 = vld [vmem:[%s3 + $0x8] sm:$0xff]
  %v169 = vld [vmem:[%s3 + $0x10] sm:$0xff]
  %v170 = vld [vmem:[%s3 + $0x18] sm:$0xff]
  %vm171 = vcmask 261120
  %v173 = vsel %vm171, 0.0, 0
  %175 = vmatprep.subr.mxu0 0.0
  %176 = vmatpush1.msra.mxu0 %v167
  %177 = vmatprep.subr.mxu0 0.0
  %178 = vmatpush1.msra.mxu0 %v168
  %179 = vmatprep.subr.mxu0 0.0
  %180 = vmatpush1.msra.mxu0 %v169
  %181 = vmatprep.subr.mxu0 0.0
  %182 = vmatpush1.msra.mxu0 %v170
  %183 = vmatprep.subr.mxu0 0.0
  %184 = vmatpush1.msra.mxu0 0.0
  %185 = vmatprep.subr.mxu0 0.0
  %186 = vmatpush1.msra.mxu0 0.0
  %187 = vmatprep.subr.mxu0 0.0
  %188 = vmatpush1.msra.mxu0 0.0
  %189 = vmatprep.subr.mxu0 0.0
  %190 = vmatpush1.msra.mxu0 0.0
  %191 = vmatprep.subr.mxu0 0.0
  %192 = vmatpush1.msra.mxu0 0.0
  %193 = vmatprep.subr.mxu0 0.0
  %194 = vmatpush1.msra.mxu0 0.0
  %195 = vmatprep.subr.mxu0 0.0
  %196 = vmatpush1.msra.mxu0 0.0
  %197 = vmatprep.subr.mxu0 0.0
  %198 = vmatpush1.msra.mxu0 0.0
  %199 = vmatprep.subr.mxu0 0.0
  %200 = vmatpush1.msra.mxu0 0.0
  %201 = vmatprep.subr.mxu0 0.0
  %202 = vmatpush1.msra.mxu0 0.0
  %203 = vmatprep.subr.mxu0 0.0
  %204 = vmatpush1.msra.mxu0 0.0
  %205 = vmatprep.subr.mxu0 0.0
  %206 = vmatpush1.msra.mxu0 0.0
  %207 = vmatprep.subr.mxu0 0.0
  %208 = vmatpush1.msra.mxu0 0.0
  %209 = vmatprep.subr.mxu0 0.0
  %210 = vmatpush1.msra.mxu0 0.0
  %211 = vmatprep.subr.mxu0 0.0
  %212 = vmatpush1.msra.mxu0 0.0
  %213 = vmatprep.subr.mxu0 0.0
  %214 = vmatpush1.msra.mxu0 0.0
  %215 = vmatprep.subr.mxu0 0.0
  %216 = vmatpush1.msra.mxu0 0.0
  %217 = vmatprep.subr.mxu0 0.0
  %218 = vmatpush1.msra.mxu0 0.0
  %219 = vmatprep.subr.mxu0 0.0
  %220 = vmatpush1.msra.mxu0 0.0
  %221 = vmatprep.subr.mxu0 0.0
  %222 = vmatpush1.msra.mxu0 0.0
  %223 = vmatprep.subr.mxu0 0.0
  %224 = vmatpush1.msra.mxu0 0.0
  %225 = vmatprep.subr.mxu0 0.0
  %226 = vmatpush1.msra.mxu0 0.0
  %227 = vmatprep.subr.mxu0 0.0
  %228 = vmatpush1.msra.mxu0 0.0
  %229 = vmatprep.subr.mxu0 0.0
  %230 = vmatpush1.msra.mxu0 0.0
  %231 = vmatprep.subr.mxu0 0.0
  %232 = vmatpush1.msra.mxu0 0.0
  %233 = vmatprep.subr.mxu0 0.0
  %234 = vmatpush1.msra.mxu0 0.0
  %235 = vmatprep.subr.mxu0 0.0
  %236 = vmatpush1.msra.mxu0 0.0
  %237 = vmatprep.subr.mxu0 0.0
  %238 = vmatpush1.msra.mxu0 0.0
  %239 = vmatprep.mubr.f32.mxu0 0.0
  %240 = vmatmul.mubr.f32.gmra.mrb[0].mxu0 %v173
  %v241 = vpop.f32.mrb[0].mxu0
  %v242 = vadd.f32 0.0, %v241
  %v243 = vpop.f32.mrb[0].mxu0
  %244 = vdwg.mxu0
  %v245 = vadd.f32 %v159, %v242
  %v246 = vxor.u32 %v245, 2147483648
  %v247 = vmul.f32 %v246, 1.442695
  %v248 = vpow.pop %v247
  %v249 = vadd.f32 %v248, 1.0
  %v250 = vrcp.pop %v249
  %v251 = vmul.f32 1.0, %v250
  %v252 = vtanh.pop %v245
  %v253 = vmul.f32 %v251, 0.0
  %255 = vrot.lane.b32.xlu0 %v252, 64
  %v256 = vpop.permute.xlu0 %255
  %v258 = vmul.f32 %v251, %v256
  %260 = vrot.lane.b32.xlu0 %v258, 32
  %v261 = vpop.permute.xlu0 %260
  %v263 = vadd.f32 %v253, %v261
  %v264 = vtanh.pop %v263
  %266 = vrot.lane.b32.xlu0 %v264, 64
  %v267 = vpop.permute.xlu0 %266
  %v269 = vmul.f32 %v251, %v267
  %v270 = vlaneseq
  %v271 = vshrl.u32 %v270, 7
  %v272 = vsub.s32 1, %v271
  %v273 = vrot.slane %v23, %v272
  %275 = vrot.lane.b32.xlu0 %v273, 96
  %v276 = vpop.permute.xlu0 %275
  %v278 = vmul.f32 %v269, %v276
  %280 = vrot.lane.b32.xlu0 %v278, 32
  %v281 = vpop.permute.xlu0 %280
  %vm283 = vcmask 254976
  %v284 = vsel %vm283, %v281, 0.0
  %285 = vadd.xlane.f32.xlu0 %v284
  %v286 = vpop.xlane.xlu0 %285
  %v287 = vtanh.pop %v286
  %v288 = vmul.f32 %v287, 1.442695
  %v289 = vpow.pop %v288
  %v290 = vadd.f32 %v289, 0.0
  %v291 = vmul.f32 %v289, %v269
  %v292 = vadd.f32 %v291, 0.0
  %294 = vrot.lane.b32.xlu0 %v269, 32
  %v295 = vpop.permute.xlu0 %294
  %v296 = vsel %vm171, %v295, 0
  %298 = vmatprep.subr.mxu0 0.0
  %299 = vmatpush1.msra.mxu0 %v167
  %300 = vmatprep.subr.mxu0 0.0
  %301 = vmatpush1.msra.mxu0 %v168
  %302 = vmatprep.subr.mxu0 0.0
  %303 = vmatpush1.msra.mxu0 %v169
  %304 = vmatprep.subr.mxu0 0.0
  %305 = vmatpush1.msra.mxu0 %v170
  %306 = vmatprep.subr.mxu0 0.0
  %307 = vmatpush1.msra.mxu0 0.0
  %308 = vmatprep.subr.mxu0 0.0
  %309 = vmatpush1.msra.mxu0 0.0
  %310 = vmatprep.subr.mxu0 0.0
  %311 = vmatpush1.msra.mxu0 0.0
  %312 = vmatprep.subr.mxu0 0.0
  %313 = vmatpush1.msra.mxu0 0.0
  %314 = vmatprep.subr.mxu0 0.0
  %315 = vmatpush1.msra.mxu0 0.0
  %316 = vmatprep.subr.mxu0 0.0
  %317 = vmatpush1.msra.mxu0 0.0
  %318 = vmatprep.subr.mxu0 0.0
  %319 = vmatpush1.msra.mxu0 0.0
  %320 = vmatprep.subr.mxu0 0.0
  %321 = vmatpush1.msra.mxu0 0.0
  %322 = vmatprep.subr.mxu0 0.0
  %323 = vmatpush1.msra.mxu0 0.0
  %324 = vmatprep.subr.mxu0 0.0
  %325 = vmatpush1.msra.mxu0 0.0
  %326 = vmatprep.subr.mxu0 0.0
  %327 = vmatpush1.msra.mxu0 0.0
  %328 = vmatprep.subr.mxu0 0.0
  %329 = vmatpush1.msra.mxu0 0.0
  %330 = vmatprep.subr.mxu0 0.0
  %331 = vmatpush1.msra.mxu0 0.0
  %332 = vmatprep.subr.mxu0 0.0
  %333 = vmatpush1.msra.mxu0 0.0
  %334 = vmatprep.subr.mxu0 0.0
  %335 = vmatpush1.msra.mxu0 0.0
  %336 = vmatprep.subr.mxu0 0.0
  %337 = vmatpush1.msra.mxu0 0.0
  %338 = vmatprep.subr.mxu0 0.0
  %339 = vmatpush1.msra.mxu0 0.0
  %340 = vmatprep.subr.mxu0 0.0
  %341 = vmatpush1.msra.mxu0 0.0
  %342 = vmatprep.subr.mxu0 0.0
  %343 = vmatpush1.msra.mxu0 0.0
  %344 = vmatprep.subr.mxu0 0.0
  %345 = vmatpush1.msra.mxu0 0.0
  %346 = vmatprep.subr.mxu0 0.0
  %347 = vmatpush1.msra.mxu0 0.0
  %348 = vmatprep.subr.mxu0 0.0
  %349 = vmatpush1.msra.mxu0 0.0
  %350 = vmatprep.subr.mxu0 0.0
  %351 = vmatpush1.msra.mxu0 0.0
  %352 = vmatprep.subr.mxu0 0.0
  %353 = vmatpush1.msra.mxu0 0.0
  %354 = vmatprep.subr.mxu0 0.0
  %355 = vmatpush1.msra.mxu0 0.0
  %356 = vmatprep.subr.mxu0 0.0
  %357 = vmatpush1.msra.mxu0 0.0
  %358 = vmatprep.subr.mxu0 0.0
  %359 = vmatpush1.msra.mxu0 0.0
  %360 = vmatprep.subr.mxu0 0.0
  %361 = vmatpush1.msra.mxu0 0.0
  %362 = vmatprep.mubr.f32.mxu0 0.0
  %363 = vmatmul.mubr.f32.gmra.mrb[0].mxu0 %v296
  %v364 = vpop.f32.mrb[0].mxu0
  %v365 = vadd.f32 0.0, %v364
  %v366 = vpop.f32.mrb[0].mxu0
  %367 = vdwg.mxu0
  %v369 = vrot.slane %v365, 6
  %v371 = vadd.f32 %v159, %v369
  %v372 = vxor.u32 %v371, 2147483648
  %v373 = vmul.f32 %v372, 1.442695
  %v374 = vpow.pop %v373
  %v375 = vadd.f32 %v374, 1.0
  %v376 = vrcp.pop %v375
  %v377 = vmul.f32 1.0, %v376
  %v378 = vtanh.pop %v371
  %v380 = vrot.slane %v263, 6
  %v382 = vmul.f32 %v377, %v380
  %384 = vrot.lane.b32.xlu0 %v378, 64
  %v385 = vpop.permute.xlu0 %384
  %v387 = vmul.f32 %v377, %v385
  %389 = vrot.lane.b32.xlu0 %v387, 32
  %v390 = vpop.permute.xlu0 %389
  %v392 = vadd.f32 %v382, %v390
  %v393 = vtanh.pop %v392
  %395 = vrot.lane.b32.xlu0 %v393, 64
  %v396 = vpop.permute.xlu0 %395
  %v398 = vmul.f32 %v377, %v396
  %v399 = vmul.f32 %v398, %v276
  %401 = vrot.lane.b32.xlu0 %v399, 32
  %v402 = vpop.permute.xlu0 %401
  %vm404 = vcmask 257026
  %v405 = vsel %vm404, %v402, 0.0
  %406 = vadd.xlane.f32.xlu0 %v405
  %v407 = vpop.xlane.xlu0 %406
  %v408 = vtanh.pop %v407
  %v409 = vmul.f32 %v408, 1.442695
  %v410 = vpow.pop %v409
  %v412 = vrot.slane %v410, 2
  %v414 = vadd.f32 %v290, %v412
  %v415 = vmul.f32 %v410, %v398
  %v417 = vrot.slane %v415, 2
  %v419 = vadd.f32 %v292, %v417
  %v421 = vrot.slane %v398, 2
  %422 = vrot.lane.b32.xlu0 %v421, 32
  %v423 = vpop.permute.xlu0 %422
  %v424 = vsel %vm171, %v423, 0
  %426 = vmatprep.subr.mxu0 0.0
  %427 = vmatpush1.msra.mxu0 %v167
  %428 = vmatprep.subr.mxu0 0.0
  %429 = vmatpush1.msra.mxu0 %v168
  %430 = vmatprep.subr.mxu0 0.0
  %431 = vmatpush1.msra.mxu0 %v169
  %432 = vmatprep.subr.mxu0 0.0
  %433 = vmatpush1.msra.mxu0 %v170
  %434 = vmatprep.subr.mxu0 0.0
  %435 = vmatpush1.msra.mxu0 0.0
  %436 = vmatprep.subr.mxu0 0.0
  %437 = vmatpush1.msra.mxu0 0.0
  %438 = vmatprep.subr.mxu0 0.0
  %439 = vmatpush1.msra.mxu0 0.0
  %440 = vmatprep.subr.mxu0 0.0
  %441 = vmatpush1.msra.mxu0 0.0
  %442 = vmatprep.subr.mxu0 0.0
  %443 = vmatpush1.msra.mxu0 0.0
  %444 = vmatprep.subr.mxu0 0.0
  %445 = vmatpush1.msra.mxu0 0.0
  %446 = vmatprep.subr.mxu0 0.0
  %447 = vmatpush1.msra.mxu0 0.0
  %448 = vmatprep.subr.mxu0 0.0
  %449 = vmatpush1.msra.mxu0 0.0
  %450 = vmatprep.subr.mxu0 0.0
  %451 = vmatpush1.msra.mxu0 0.0
  %452 = vmatprep.subr.mxu0 0.0
  %453 = vmatpush1.msra.mxu0 0.0
  %454 = vmatprep.subr.mxu0 0.0
  %455 = vmatpush1.msra.mxu0 0.0
  %456 = vmatprep.subr.mxu0 0.0
  %457 = vmatpush1.msra.mxu0 0.0
  %458 = vmatprep.subr.mxu0 0.0
  %459 = vmatpush1.msra.mxu0 0.0
  %460 = vmatprep.subr.mxu0 0.0
  %461 = vmatpush1.msra.mxu0 0.0
  %462 = vmatprep.subr.mxu0 0.0
  %463 = vmatpush1.msra.mxu0 0.0
  %464 = vmatprep.subr.mxu0 0.0
  %465 = vmatpush1.msra.mxu0 0.0
  %466 = vmatprep.subr.mxu0 0.0
  %467 = vmatpush1.msra.mxu0 0.0
  %468 = vmatprep.subr.mxu0 0.0
  %469 = vmatpush1.msra.mxu0 0.0
  %470 = vmatprep.subr.mxu0 0.0
  %471 = vmatpush1.msra.mxu0 0.0
  %472 = vmatprep.subr.mxu0 0.0
  %473 = vmatpush1.msra.mxu0 0.0
  %474 = vmatprep.subr.mxu0 0.0
  %475 = vmatpush1.msra.mxu0 0.0
  %476 = vmatprep.subr.mxu0 0.0
  %477 = vmatpush1.msra.mxu0 0.0
  %478 = vmatprep.subr.mxu0 0.0
  %479 = vmatpush1.msra.mxu0 0.0
  %480 = vmatprep.subr.mxu0 0.0
  %481 = vmatpush1.msra.mxu0 0.0
  %482 = vmatprep.subr.mxu0 0.0
  %483 = vmatpush1.msra.mxu0 0.0
  %484 = vmatprep.subr.mxu0 0.0
  %485 = vmatpush1.msra.mxu0 0.0
  %486 = vmatprep.subr.mxu0 0.0
  %487 = vmatpush1.msra.mxu0 0.0
  %488 = vmatprep.subr.mxu0 0.0
  %489 = vmatpush1.msra.mxu0 0.0
  %490 = vmatprep.mubr.f32.mxu0 0.0
  %491 = vmatmul.mubr.f32.gmra.mrb[0].mxu0 %v424
  %v492 = vpop.f32.mrb[0].mxu0
  %v493 = vadd.f32 0.0, %v492
  %v494 = vpop.f32.mrb[0].mxu0
  %495 = vdwg.mxu0
  %v497 = vrot.slane %v493, 4
  %v499 = vadd.f32 %v159, %v497
  %v500 = vxor.u32 %v499, 2147483648
  %v501 = vmul.f32 %v500, 1.442695
  %v502 = vpow.pop %v501
  %v503 = vadd.f32 %v502, 1.0
  %v504 = vrcp.pop %v503
  %v505 = vmul.f32 1.0, %v504
  %v506 = vtanh.pop %v499
  %v508 = vrot.slane %v392, 6
  %v510 = vmul.f32 %v505, %v508
  %512 = vrot.lane.b32.xlu0 %v506, 64
  %v513 = vpop.permute.xlu0 %512
  %v515 = vmul.f32 %v505, %v513
  %517 = vrot.lane.b32.xlu0 %v515, 32
  %v518 = vpop.permute.xlu0 %517
  %v520 = vadd.f32 %v510, %v518
  %v521 = vtanh.pop %v520
  %523 = vrot.lane.b32.xlu0 %v521, 64
  %v524 = vpop.permute.xlu0 %523
  %v526 = vmul.f32 %v505, %v524
  %v527 = vmul.f32 %v526, %v276
  %529 = vrot.lane.b32.xlu0 %v527, 32
  %v530 = vpop.permute.xlu0 %529
  %vm532 = vcmask 259076
  %v533 = vsel %vm532, %v530, 0.0
  %534 = vadd.xlane.f32.xlu0 %v533
  %v535 = vpop.xlane.xlu0 %534
  %v536 = vtanh.pop %v535
  %v537 = vmul.f32 %v536, 1.442695
  %v538 = vpow.pop %v537
  %v540 = vrot.slane %v538, 4
  %v542 = vadd.f32 %v414, %v540
  %v543 = vmul.f32 %v538, %v526
  %v545 = vrot.slane %v543, 4
  %v547 = vadd.f32 %v419, %v545
  %v549 = vrot.slane %v526, 4
  %550 = vrot.lane.b32.xlu0 %v549, 32
  %v551 = vpop.permute.xlu0 %550
  %v552 = vsel %vm171, %v551, 0
  %554 = vmatprep.subr.mxu0 0.0
  %555 = vmatpush1.msra.mxu0 %v167
  %556 = vmatprep.subr.mxu0 0.0
  %557 = vmatpush1.msra.mxu0 %v168
  %558 = vmatprep.subr.mxu0 0.0
  %559 = vmatpush1.msra.mxu0 %v169
  %560 = vmatprep.subr.mxu0 0.0
  %561 = vmatpush1.msra.mxu0 %v170
  %562 = vmatprep.subr.mxu0 0.0
  %563 = vmatpush1.msra.mxu0 0.0
  %564 = vmatprep.subr.mxu0 0.0
  %565 = vmatpush1.msra.mxu0 0.0
  %566 = vmatprep.subr.mxu0 0.0
  %567 = vmatpush1.msra.mxu0 0.0
  %568 = vmatprep.subr.mxu0 0.0
  %569 = vmatpush1.msra.mxu0 0.0
  %570 = vmatprep.subr.mxu0 0.0
  %571 = vmatpush1.msra.mxu0 0.0
  %572 = vmatprep.subr.mxu0 0.0
  %573 = vmatpush1.msra.mxu0 0.0
  %574 = vmatprep.subr.mxu0 0.0
  %575 = vmatpush1.msra.mxu0 0.0
  %576 = vmatprep.subr.mxu0 0.0
  %577 = vmatpush1.msra.mxu0 0.0
  %578 = vmatprep.subr.mxu0 0.0
  %579 = vmatpush1.msra.mxu0 0.0
  %580 = vmatprep.subr.mxu0 0.0
  %581 = vmatpush1.msra.mxu0 0.0
  %582 = vmatprep.subr.mxu0 0.0
  %583 = vmatpush1.msra.mxu0 0.0
  %584 = vmatprep.subr.mxu0 0.0
  %585 = vmatpush1.msra.mxu0 0.0
  %586 = vmatprep.subr.mxu0 0.0
  %587 = vmatpush1.msra.mxu0 0.0
  %588 = vmatprep.subr.mxu0 0.0
  %589 = vmatpush1.msra.mxu0 0.0
  %590 = vmatprep.subr.mxu0 0.0
  %591 = vmatpush1.msra.mxu0 0.0
  %592 = vmatprep.subr.mxu0 0.0
  %593 = vmatpush1.msra.mxu0 0.0
  %594 = vmatprep.subr.mxu0 0.0
  %595 = vmatpush1.msra.mxu0 0.0
  %596 = vmatprep.subr.mxu0 0.0
  %597 = vmatpush1.msra.mxu0 0.0
  %598 = vmatprep.subr.mxu0 0.0
  %599 = vmatpush1.msra.mxu0 0.0
  %600 = vmatprep.subr.mxu0 0.0
  %601 = vmatpush1.msra.mxu0 0.0
  %602 = vmatprep.subr.mxu0 0.0
  %603 = vmatpush1.msra.mxu0 0.0
  %604 = vmatprep.subr.mxu0 0.0
  %605 = vmatpush1.msra.mxu0 0.0
  %606 = vmatprep.subr.mxu0 0.0
  %607 = vmatpush1.msra.mxu0 0.0
  %608 = vmatprep.subr.mxu0 0.0
  %609 = vmatpush1.msra.mxu0 0.0
  %610 = vmatprep.subr.mxu0 0.0
  %611 = vmatpush1.msra.mxu0 0.0
  %612 = vmatprep.subr.mxu0 0.0
  %613 = vmatpush1.msra.mxu0 0.0
  %614 = vmatprep.subr.mxu0 0.0
  %615 = vmatpush1.msra.mxu0 0.0
  %616 = vmatprep.subr.mxu0 0.0
  %617 = vmatpush1.msra.mxu0 0.0
  %618 = vmatprep.mubr.f32.mxu0 0.0
  %619 = vmatmul.mubr.f32.gmra.mrb[0].mxu0 %v552
  %v620 = vpop.f32.mrb[0].mxu0
  %v621 = vadd.f32 0.0, %v620
  %v622 = vpop.f32.mrb[0].mxu0
  %623 = vdwg.mxu0
  %v625 = vrot.slane %v621, 2
  %v627 = vadd.f32 %v159, %v625
  %v628 = vxor.u32 %v627, 2147483648
  %v629 = vmul.f32 %v628, 1.442695
  %v630 = vpow.pop %v629
  %v631 = vadd.f32 %v630, 1.0
  %v632 = vrcp.pop %v631
  %v633 = vmul.f32 1.0, %v632
  %v634 = vtanh.pop %v627
  %v636 = vrot.slane %v520, 6
  %v638 = vmul.f32 %v633, %v636
  %640 = vrot.lane.b32.xlu0 %v634, 64
  %v641 = vpop.permute.xlu0 %640
  %v643 = vmul.f32 %v633, %v641
  %645 = vrot.lane.b32.xlu0 %v643, 32
  %v646 = vpop.permute.xlu0 %645
  %v648 = vadd.f32 %v638, %v646
  %v649 = vtanh.pop %v648
  %651 = vrot.lane.b32.xlu0 %v649, 64
  %v652 = vpop.permute.xlu0 %651
  %v654 = vmul.f32 %v633, %v652
  %v655 = vmul.f32 %v654, %v276
  %657 = vrot.lane.b32.xlu0 %v655, 32
  %v658 = vpop.permute.xlu0 %657
  %vm660 = vcmask 261126
  %v661 = vsel %vm660, %v658, 0.0
  %662 = vadd.xlane.f32.xlu0 %v661
  %v663 = vpop.xlane.xlu0 %662
  %v664 = vtanh.pop %v663
  %v665 = vmul.f32 %v664, 1.442695
  %v666 = vpow.pop %v665
  %v668 = vrot.slane %v666, 6
  %v670 = vadd.f32 %v542, %v668
  %v671 = vmul.f32 %v666, %v654
  %v673 = vrot.slane %v671, 6
  %v675 = vadd.f32 %v547, %v673
  %v677 = vrot.slane %v654, 6
  %678 = vrot.lane.b32.xlu0 %v677, 32
  %v679 = vpop.permute.xlu0 %678
  %v680 = vsel %vm171, %v679, 0
  %682 = vmatprep.subr.mxu0 0.0
  %683 = vmatpush1.msra.mxu0 %v167
  %684 = vmatprep.subr.mxu0 0.0
  %685 = vmatpush1.msra.mxu0 %v168
  %686 = vmatprep.subr.mxu0 0.0
  %687 = vmatpush1.msra.mxu0 %v169
  %688 = vmatprep.subr.mxu0 0.0
  %689 = vmatpush1.msra.mxu0 %v170
  %690 = vmatprep.subr.mxu0 0.0
  %691 = vmatpush1.msra.mxu0 0.0
  %692 = vmatprep.subr.mxu0 0.0
  %693 = vmatpush1.msra.mxu0 0.0
  %694 = vmatprep.subr.mxu0 0.0
  %695 = vmatpush1.msra.mxu0 0.0
  %696 = vmatprep.subr.mxu0 0.0
  %697 = vmatpush1.msra.mxu0 0.0
  %698 = vmatprep.subr.mxu0 0.0
  %699 = vmatpush1.msra.mxu0 0.0
  %700 = vmatprep.subr.mxu0 0.0
  %701 = vmatpush1.msra.mxu0 0.0
  %702 = vmatprep.subr.mxu0 0.0
  %703 = vmatpush1.msra.mxu0 0.0
  %704 = vmatprep.subr.mxu0 0.0
  %705 = vmatpush1.msra.mxu0 0.0
  %706 = vmatprep.subr.mxu0 0.0
  %707 = vmatpush1.msra.mxu0 0.0
  %708 = vmatprep.subr.mxu0 0.0
  %709 = vmatpush1.msra.mxu0 0.0
  %710 = vmatprep.subr.mxu0 0.0
  %711 = vmatpush1.msra.mxu0 0.0
  %712 = vmatprep.subr.mxu0 0.0
  %713 = vmatpush1.msra.mxu0 0.0
  %714 = vmatprep.subr.mxu0 0.0
  %715 = vmatpush1.msra.mxu0 0.0
  %716 = vmatprep.subr.mxu0 0.0
  %717 = vmatpush1.msra.mxu0 0.0
  %718 = vmatprep.subr.mxu0 0.0
  %719 = vmatpush1.msra.mxu0 0.0
  %720 = vmatprep.subr.mxu0 0.0
  %721 = vmatpush1.msra.mxu0 0.0
  %722 = vmatprep.subr.mxu0 0.0
  %723 = vmatpush1.msra.mxu0 0.0
  %724 = vmatprep.subr.mxu0 0.0
  %725 = vmatpush1.msra.mxu0 0.0
  %726 = vmatprep.subr.mxu0 0.0
  %727 = vmatpush1.msra.mxu0 0.0
  %728 = vmatprep.subr.mxu0 0.0
  %729 = vmatpush1.msra.mxu0 0.0
  %730 = vmatprep.subr.mxu0 0.0
  %731 = vmatpush1.msra.mxu0 0.0
  %732 = vmatprep.subr.mxu0 0.0
  %733 = vmatpush1.msra.mxu0 0.0
  %734 = vmatprep.subr.mxu0 0.0
  %735 = vmatpush1.msra.mxu0 0.0
  %736 = vmatprep.subr.mxu0 0.0
  %737 = vmatpush1.msra.mxu0 0.0
  %738 = vmatprep.subr.mxu0 0.0
  %739 = vmatpush1.msra.mxu0 0.0
  %740 = vmatprep.subr.mxu0 0.0
  %741 = vmatpush1.msra.mxu0 0.0
  %742 = vmatprep.subr.mxu0 0.0
  %743 = vmatpush1.msra.mxu0 0.0
  %744 = vmatprep.subr.mxu0 0.0
  %745 = vmatpush1.msra.mxu0 0.0
  %746 = vmatprep.mubr.f32.mxu0 0.0
  %747 = vmatmul.mubr.f32.gmra.mrb[0].mxu0 %v680
  %v748 = vpop.f32.mrb[0].mxu0
  %v749 = vadd.f32 0.0, %v748
  %v750 = vpop.f32.mrb[0].mxu0
  %751 = vdwg.mxu0
  %v752 = vadd.f32 %v164, %v749
  %v753 = vxor.u32 %v752, 2147483648
  %v754 = vmul.f32 %v753, 1.442695
  %v755 = vpow.pop %v754
  %v756 = vadd.f32 %v755, 1.0
  %v757 = vrcp.pop %v756
  %v758 = vmul.f32 1.0, %v757
  %v759 = vtanh.pop %v752
  %v761 = vrot.slane %v648, 6
  %v763 = vmul.f32 %v758, %v761
  %765 = vrot.lane.b32.xlu0 %v759, 64
  %v766 = vpop.permute.xlu0 %765
  %v768 = vmul.f32 %v758, %v766
  %770 = vrot.lane.b32.xlu0 %v768, 32
  %v771 = vpop.permute.xlu0 %770
  %v773 = vadd.f32 %v763, %v771
  %v774 = vtanh.pop %v773
  %776 = vrot.lane.b32.xlu0 %v774, 64
  %v777 = vpop.permute.xlu0 %776
  %v779 = vmul.f32 %v758, %v777
  %v780 = vmul.f32 %v779, %v276
  %782 = vrot.lane.b32.xlu0 %v780, 32
  %v783 = vpop.permute.xlu0 %782
  %v785 = vsel %vm283, %v783, 0.0
  %786 = vadd.xlane.f32.xlu0 %v785
  %v787 = vpop.xlane.xlu0 %786
  %v788 = vtanh.pop %v787
  %v789 = vmul.f32 %v788, 1.442695
  %v790 = vpow.pop %v789
  %v791 = vadd.f32 %v670, %v790
  %v792 = vmul.f32 %v790, %v779
  %v793 = vadd.f32 %v675, %v792
  %795 = vrot.lane.b32.xlu0 %v779, 32
  %v796 = vpop.permute.xlu0 %795
  %v797 = vsel %vm171, %v796, 0
  %799 = vmatprep.subr.mxu0 0.0
  %800 = vmatpush1.msra.mxu0 %v167
  %801 = vmatprep.subr.mxu0 0.0
  %802 = vmatpush1.msra.mxu0 %v168
  %803 = vmatprep.subr.mxu0 0.0
  %804 = vmatpush1.msra.mxu0 %v169
  %805 = vmatprep.subr.mxu0 0.0
  %806 = vmatpush1.msra.mxu0 %v170
  %807 = vmatprep.subr.mxu0 0.0
  %808 = vmatpush1.msra.mxu0 0.0
  %809 = vmatprep.subr.mxu0 0.0
  %810 = vmatpush1.msra.mxu0 0.0
  %811 = vmatprep.subr.mxu0 0.0
  %812 = vmatpush1.msra.mxu0 0.0
  %813 = vmatprep.subr.mxu0 0.0
  %814 = vmatpush1.msra.mxu0 0.0
  %815 = vmatprep.subr.mxu0 0.0
  %816 = vmatpush1.msra.mxu0 0.0
  %817 = vmatprep.subr.mxu0 0.0
  %818 = vmatpush1.msra.mxu0 0.0
  %819 = vmatprep.subr.mxu0 0.0
  %820 = vmatpush1.msra.mxu0 0.0
  %821 = vmatprep.subr.mxu0 0.0
  %822 = vmatpush1.msra.mxu0 0.0
  %823 = vmatprep.subr.mxu0 0.0
  %824 = vmatpush1.msra.mxu0 0.0
  %825 = vmatprep.subr.mxu0 0.0
  %826 = vmatpush1.msra.mxu0 0.0
  %827 = vmatprep.subr.mxu0 0.0
  %828 = vmatpush1.msra.mxu0 0.0
  %829 = vmatprep.subr.mxu0 0.0
  %830 = vmatpush1.msra.mxu0 0.0
  %831 = vmatprep.subr.mxu0 0.0
  %832 = vmatpush1.msra.mxu0 0.0
  %833 = vmatprep.subr.mxu0 0.0
  %834 = vmatpush1.msra.mxu0 0.0
  %835 = vmatprep.subr.mxu0 0.0
  %836 = vmatpush1.msra.mxu0 0.0
  %837 = vmatprep.subr.mxu0 0.0
  %838 = vmatpush1.msra.mxu0 0.0
  %839 = vmatprep.subr.mxu0 0.0
  %840 = vmatpush1.msra.mxu0 0.0
  %841 = vmatprep.subr.mxu0 0.0
  %842 = vmatpush1.msra.mxu0 0.0
  %843 = vmatprep.subr.mxu0 0.0
  %844 = vmatpush1.msra.mxu0 0.0
  %845 = vmatprep.subr.mxu0 0.0
  %846 = vmatpush1.msra.mxu0 0.0
  %847 = vmatprep.subr.mxu0 0.0
  %848 = vmatpush1.msra.mxu0 0.0
  %849 = vmatprep.subr.mxu0 0.0
  %850 = vmatpush1.msra.mxu0 0.0
  %851 = vmatprep.subr.mxu0 0.0
  %852 = vmatpush1.msra.mxu0 0.0
  %853 = vmatprep.subr.mxu0 0.0
  %854 = vmatpush1.msra.mxu0 0.0
  %855 = vmatprep.subr.mxu0 0.0
  %856 = vmatpush1.msra.mxu0 0.0
  %857 = vmatprep.subr.mxu0 0.0
  %858 = vmatpush1.msra.mxu0 0.0
  %859 = vmatprep.subr.mxu0 0.0
  %860 = vmatpush1.msra.mxu0 0.0
  %861 = vmatprep.subr.mxu0 0.0
  %862 = vmatpush1.msra.mxu0 0.0
  %863 = vmatprep.mubr.f32.mxu0 0.0
  %864 = vmatmul.mubr.f32.gmra.mrb[0].mxu0 %v797
  %v865 = vpop.f32.mrb[0].mxu0
  %v866 = vadd.f32 0.0, %v865
  %v867 = vpop.f32.mrb[0].mxu0
  %868 = vdwg.mxu0
  %v870 = vrot.slane %v866, 6
  %v872 = vadd.f32 %v164, %v870
  %v873 = vxor.u32 %v872, 2147483648
  %v874 = vmul.f32 %v873, 1.442695
  %v875 = vpow.pop %v874
  %v876 = vadd.f32 %v875, 1.0
  %v877 = vrcp.pop %v876
  %v878 = vmul.f32 1.0, %v877
  %v879 = vtanh.pop %v872
  %v881 = vrot.slane %v773, 6
  %v883 = vmul.f32 %v878, %v881
  %885 = vrot.lane.b32.xlu0 %v879, 64
  %v886 = vpop.permute.xlu0 %885
  %v888 = vmul.f32 %v878, %v886
  %890 = vrot.lane.b32.xlu0 %v888, 32
  %v891 = vpop.permute.xlu0 %890
  %v893 = vadd.f32 %v883, %v891
  %v894 = vtanh.pop %v893
  %896 = vrot.lane.b32.xlu0 %v894, 64
  %v897 = vpop.permute.xlu0 %896
  %v899 = vmul.f32 %v878, %v897
  %v900 = vmul.f32 %v899, %v276
  %902 = vrot.lane.b32.xlu0 %v900, 32
  %v903 = vpop.permute.xlu0 %902
  %v905 = vsel %vm404, %v903, 0.0
  %906 = vadd.xlane.f32.xlu0 %v905
  %v907 = vpop.xlane.xlu0 %906
  %v908 = vtanh.pop %v907
  %v909 = vmul.f32 %v908, 1.442695
  %v910 = vpow.pop %v909
  %v912 = vrot.slane %v910, 2
  %v914 = vadd.f32 %v791, %v912
  %v915 = vmul.f32 %v910, %v899
  %v917 = vrot.slane %v915, 2
  %v919 = vadd.f32 %v793, %v917
  %v921 = vrot.slane %v899, 2
  %922 = vrot.lane.b32.xlu0 %v921, 32
  %v923 = vpop.permute.xlu0 %922
  %v924 = vsel %vm171, %v923, 0
  %926 = vmatprep.subr.mxu0 0.0
  %927 = vmatpush1.msra.mxu0 %v167
  %928 = vmatprep.subr.mxu0 0.0
  %929 = vmatpush1.msra.mxu0 %v168
  %930 = vmatprep.subr.mxu0 0.0
  %931 = vmatpush1.msra.mxu0 %v169
  %932 = vmatprep.subr.mxu0 0.0
  %933 = vmatpush1.msra.mxu0 %v170
  %934 = vmatprep.subr.mxu0 0.0
  %935 = vmatpush1.msra.mxu0 0.0
  %936 = vmatprep.subr.mxu0 0.0
  %937 = vmatpush1.msra.mxu0 0.0
  %938 = vmatprep.subr.mxu0 0.0
  %939 = vmatpush1.msra.mxu0 0.0
  %940 = vmatprep.subr.mxu0 0.0
  %941 = vmatpush1.msra.mxu0 0.0
  %942 = vmatprep.subr.mxu0 0.0
  %943 = vmatpush1.msra.mxu0 0.0
  %944 = vmatprep.subr.mxu0 0.0
  %945 = vmatpush1.msra.mxu0 0.0
  %946 = vmatprep.subr.mxu0 0.0
  %947 = vmatpush1.msra.mxu0 0.0
  %948 = vmatprep.subr.mxu0 0.0
  %949 = vmatpush1.msra.mxu0 0.0
  %950 = vmatprep.subr.mxu0 0.0
  %951 = vmatpush1.msra.mxu0 0.0
  %952 = vmatprep.subr.mxu0 0.0
  %953 = vmatpush1.msra.mxu0 0.0
  %954 = vmatprep.subr.mxu0 0.0
  %955 = vmatpush1.msra.mxu0 0.0
  %956 = vmatprep.subr.mxu0 0.0
  %957 = vmatpush1.msra.mxu0 0.0
  %958 = vmatprep.subr.mxu0 0.0
  %959 = vmatpush1.msra.mxu0 0.0
  %960 = vmatprep.subr.mxu0 0.0
  %961 = vmatpush1.msra.mxu0 0.0
  %962 = vmatprep.subr.mxu0 0.0
  %963 = vmatpush1.msra.mxu0 0.0
  %964 = vmatprep.subr.mxu0 0.0
  %965 = vmatpush1.msra.mxu0 0.0
  %966 = vmatprep.subr.mxu0 0.0
  %967 = vmatpush1.msra.mxu0 0.0
  %968 = vmatprep.subr.mxu0 0.0
  %969 = vmatpush1.msra.mxu0 0.0
  %970 = vmatprep.subr.mxu0 0.0
  %971 = vmatpush1.msra.mxu0 0.0
  %972 = vmatprep.subr.mxu0 0.0
  %973 = vmatpush1.msra.mxu0 0.0
  %974 = vmatprep.subr.mxu0 0.0
  %975 = vmatpush1.msra.mxu0 0.0
  %976 = vmatprep.subr.mxu0 0.0
  %977 = vmatpush1.msra.mxu0 0.0
  %978 = vmatprep.subr.mxu0 0.0
  %979 = vmatpush1.msra.mxu0 0.0
  %980 = vmatprep.subr.mxu0 0.0
  %981 = vmatpush1.msra.mxu0 0.0
  %982 = vmatprep.subr.mxu0 0.0
  %983 = vmatpush1.msra.mxu0 0.0
  %984 = vmatprep.subr.mxu0 0.0
  %985 = vmatpush1.msra.mxu0 0.0
  %986 = vmatprep.subr.mxu0 0.0
  %987 = vmatpush1.msra.mxu0 0.0
  %988 = vmatprep.subr.mxu0 0.0
  %989 = vmatpush1.msra.mxu0 0.0
  %990 = vmatprep.mubr.f32.mxu0 0.0
  %991 = vmatmul.mubr.f32.gmra.mrb[0].mxu0 %v924
  %v992 = vpop.f32.mrb[0].mxu0
  %v993 = vadd.f32 0.0, %v992
  %v994 = vpop.f32.mrb[0].mxu0
  %995 = vdwg.mxu0
  %v997 = vrot.slane %v993, 4
  %v999 = vadd.f32 %v164, %v997
  %v1000 = vxor.u32 %v999, 2147483648
  %v1001 = vmul.f32 %v1000, 1.442695
  %v1002 = vpow.pop %v1001
  %v1003 = vadd.f32 %v1002, 1.0
  %v1004 = vrcp.pop %v1003
  %v1005 = vmul.f32 1.0, %v1004
  %v1006 = vtanh.pop %v999
  %v1008 = vrot.slane %v893, 6
  %v1010 = vmul.f32 %v1005, %v1008
  %1012 = vrot.lane.b32.xlu0 %v1006, 64
  %v1013 = vpop.permute.xlu0 %1012
  %v1015 = vmul.f32 %v1005, %v1013
  %1017 = vrot.lane.b32.xlu0 %v1015, 32
  %v1018 = vpop.permute.xlu0 %1017
  %v1020 = vadd.f32 %v1010, %v1018
  %v1021 = vtanh.pop %v1020
  %1023 = vrot.lane.b32.xlu0 %v1021, 64
  %v1024 = vpop.permute.xlu0 %1023
  %v1026 = vmul.f32 %v1005, %v1024
  %v1027 = vmul.f32 %v1026, %v276
  %1029 = vrot.lane.b32.xlu0 %v1027, 32
  %v1030 = vpop.permute.xlu0 %1029
  %v1032 = vsel %vm532, %v1030, 0.0
  %1033 = vadd.xlane.f32.xlu0 %v1032
  %v1034 = vpop.xlane.xlu0 %1033
  %v1035 = vtanh.pop %v1034
  %v1036 = vmul.f32 %v1035, 1.442695
  %v1037 = vpow.pop %v1036
  %v1039 = vrot.slane %v1037, 4
  %v1041 = vadd.f32 %v914, %v1039
  %v1042 = vmul.f32 %v1037, %v1026
  %v1044 = vrot.slane %v1042, 4
  %v1046 = vadd.f32 %v919, %v1044
  %v1048 = vrot.slane %v1026, 4
  %1049 = vrot.lane.b32.xlu0 %v1048, 32
  %v1050 = vpop.permute.xlu0 %1049
  %v1051 = vsel %vm171, %v1050, 0
  %1053 = vmatprep.subr.mxu0 0.0
  %1054 = vmatpush1.msra.mxu0 %v167
  %1055 = vmatprep.subr.mxu0 0.0
  %1056 = vmatpush1.msra.mxu0 %v168
  %1057 = vmatprep.subr.mxu0 0.0
  %1058 = vmatpush1.msra.mxu0 %v169
  %1059 = vmatprep.subr.mxu0 0.0
  %1060 = vmatpush1.msra.mxu0 %v170
  %1061 = vmatprep.subr.mxu0 0.0
  %1062 = vmatpush1.msra.mxu0 0.0
  %1063 = vmatprep.subr.mxu0 0.0
  %1064 = vmatpush1.msra.mxu0 0.0
  %1065 = vmatprep.subr.mxu0 0.0
  %1066 = vmatpush1.msra.mxu0 0.0
  %1067 = vmatprep.subr.mxu0 0.0
  %1068 = vmatpush1.msra.mxu0 0.0
  %1069 = vmatprep.subr.mxu0 0.0
  %1070 = vmatpush1.msra.mxu0 0.0
  %1071 = vmatprep.subr.mxu0 0.0
  %1072 = vmatpush1.msra.mxu0 0.0
  %1073 = vmatprep.subr.mxu0 0.0
  %1074 = vmatpush1.msra.mxu0 0.0
  %1075 = vmatprep.subr.mxu0 0.0
  %1076 = vmatpush1.msra.mxu0 0.0
  %1077 = vmatprep.subr.mxu0 0.0
  %1078 = vmatpush1.msra.mxu0 0.0
  %1079 = vmatprep.subr.mxu0 0.0
  %1080 = vmatpush1.msra.mxu0 0.0
  %1081 = vmatprep.subr.mxu0 0.0
  %1082 = vmatpush1.msra.mxu0 0.0
  %1083 = vmatprep.subr.mxu0 0.0
  %1084 = vmatpush1.msra.mxu0 0.0
  %1085 = vmatprep.subr.mxu0 0.0
  %1086 = vmatpush1.msra.mxu0 0.0
  %1087 = vmatprep.subr.mxu0 0.0
  %1088 = vmatpush1.msra.mxu0 0.0
  %1089 = vmatprep.subr.mxu0 0.0
  %1090 = vmatpush1.msra.mxu0 0.0
  %1091 = vmatprep.subr.mxu0 0.0
  %1092 = vmatpush1.msra.mxu0 0.0
  %1093 = vmatprep.subr.mxu0 0.0
  %1094 = vmatpush1.msra.mxu0 0.0
  %1095 = vmatprep.subr.mxu0 0.0
  %1096 = vmatpush1.msra.mxu0 0.0
  %1097 = vmatprep.subr.mxu0 0.0
  %1098 = vmatpush1.msra.mxu0 0.0
  %1099 = vmatprep.subr.mxu0 0.0
  %1100 = vmatpush1.msra.mxu0 0.0
  %1101 = vmatprep.subr.mxu0 0.0
  %1102 = vmatpush1.msra.mxu0 0.0
  %1103 = vmatprep.subr.mxu0 0.0
  %1104 = vmatpush1.msra.mxu0 0.0
  %1105 = vmatprep.subr.mxu0 0.0
  %1106 = vmatpush1.msra.mxu0 0.0
  %1107 = vmatprep.subr.mxu0 0.0
  %1108 = vmatpush1.msra.mxu0 0.0
  %1109 = vmatprep.subr.mxu0 0.0
  %1110 = vmatpush1.msra.mxu0 0.0
  %1111 = vmatprep.subr.mxu0 0.0
  %1112 = vmatpush1.msra.mxu0 0.0
  %1113 = vmatprep.subr.mxu0 0.0
  %1114 = vmatpush1.msra.mxu0 0.0
  %1115 = vmatprep.subr.mxu0 0.0
  %1116 = vmatpush1.msra.mxu0 0.0
  %1117 = vmatprep.mubr.f32.mxu0 0.0
  %1118 = vmatmul.mubr.f32.gmra.mrb[0].mxu0 %v1051
  %v1119 = vpop.f32.mrb[0].mxu0
  %v1120 = vadd.f32 0.0, %v1119
  %v1121 = vpop.f32.mrb[0].mxu0
  %1122 = vdwg.mxu0
  %v1124 = vrot.slane %v1120, 2
  %v1126 = vadd.f32 %v164, %v1124
  %v1127 = vxor.u32 %v1126, 2147483648
  %v1128 = vmul.f32 %v1127, 1.442695
  %v1129 = vpow.pop %v1128
  %v1130 = vadd.f32 %v1129, 1.0
  %v1131 = vrcp.pop %v1130
  %v1132 = vmul.f32 1.0, %v1131
  %v1133 = vtanh.pop %v1126
  %v1135 = vrot.slane %v1020, 6
  %v1137 = vmul.f32 %v1132, %v1135
  %1139 = vrot.lane.b32.xlu0 %v1133, 64
  %v1140 = vpop.permute.xlu0 %1139
  %v1142 = vmul.f32 %v1132, %v1140
  %1144 = vrot.lane.b32.xlu0 %v1142, 32
  %v1145 = vpop.permute.xlu0 %1144
  %v1147 = vadd.f32 %v1137, %v1145
  %v1148 = vtanh.pop %v1147
  %1150 = vrot.lane.b32.xlu0 %v1148, 64
  %v1151 = vpop.permute.xlu0 %1150
  %v1153 = vmul.f32 %v1132, %v1151
  %v1154 = vmul.f32 %v1153, %v276
  %1156 = vrot.lane.b32.xlu0 %v1154, 32
  %v1157 = vpop.permute.xlu0 %1156
  %v1159 = vsel %vm660, %v1157, 0.0
  %1160 = vadd.xlane.f32.xlu0 %v1159
  %v1161 = vpop.xlane.xlu0 %1160
  %v1162 = vtanh.pop %v1161
  %v1163 = vmul.f32 %v1162, 1.442695
  %v1164 = vpow.pop %v1163
  %v1166 = vrot.slane %v1164, 6
  %v1168 = vadd.f32 %v1041, %v1166
  %v1169 = vmul.f32 %v1164, %v1153
  %v1171 = vrot.slane %v1169, 6
  %v1173 = vadd.f32 %v1046, %v1171
  %v1174 = vrcp.pop %v1168
  %1176 = vset.pattern.permute.xlu0 0
  %1177 = vperm.xlu0 %1176, %v1174
  %v1178 = vpop.permute.xlu0 %1177
  %v1180 = vmul.f32 %v1173, %v1178
  %v1181 = vmax.f32 %v1180, 0.0
  %v1182 = vld [vmem:[%s4] sm:$0xff]
  %v1183 = vld [vmem:[%s4 + $0x8] sm:$0xff]
  %v1184 = vld [vmem:[%s4 + $0x10] sm:$0xff]
  %v1185 = vld [vmem:[%s4 + $0x18] sm:$0xff]
  %v1186 = vld [vmem:[%s4 + $0x20] sm:$0xff]
  %v1187 = vld [vmem:[%s4 + $0x28] sm:$0xff]
  %v1188 = vld [vmem:[%s4 + $0x30] sm:$0xff]
  %v1189 = vld [vmem:[%s4 + $0x38] sm:$0xff]
  %v1190 = vld [vmem:[%s4 + $0x40] sm:$0xff]
  %v1191 = vld [vmem:[%s4 + $0x48] sm:$0xff]
  %v1192 = vld [vmem:[%s4 + $0x50] sm:$0xff]
  %v1193 = vld [vmem:[%s4 + $0x58] sm:$0xff]
  %v1194 = vld [vmem:[%s4 + $0x60] sm:$0xff]
  %v1195 = vld [vmem:[%s4 + $0x68] sm:$0xff]
  %v1196 = vld [vmem:[%s4 + $0x70] sm:$0xff]
  %v1197 = vld [vmem:[%s4 + $0x78] sm:$0xff]
  %v1198 = vld [vmem:[%s4 + $0x80] sm:$0x3]
  %v1199 = vld [vmem:[%s4 + $0x88] sm:$0xff]
  %v1200 = vld [vmem:[%s4 + $0x90] sm:$0xff]
  %v1201 = vld [vmem:[%s4 + $0x98] sm:$0x1]
  %v1202 = vlaneseq
  %v1203 = vshrl.u32 %v1202, 7
  %v1204 = vsub.s32 2, %v1203
  %v1205 = vrot.slane %v23, %v1204
  %1207 = vrot.lane.b32.xlu0 %v1181, 32
  %v1208 = vpop.permute.xlu0 %1207
  %v1209 = vsel %vm171, %v1208, 0
  %1211 = vmatprep.subr.mxu0 0.0
  %1212 = vmatpush1.msra.mxu0 %v1182
  %1213 = vmatprep.subr.mxu0 0.0
  %1214 = vmatpush1.msra.mxu0 %v1183
  %1215 = vmatprep.subr.mxu0 0.0
  %1216 = vmatpush1.msra.mxu0 %v1184
  %1217 = vmatprep.subr.mxu0 0.0
  %1218 = vmatpush1.msra.mxu0 %v1185
  %1219 = vmatprep.subr.mxu0 0.0
  %1220 = vmatpush1.msra.mxu0 0.0
  %1221 = vmatprep.subr.mxu0 0.0
  %1222 = vmatpush1.msra.mxu0 0.0
  %1223 = vmatprep.subr.mxu0 0.0
  %1224 = vmatpush1.msra.mxu0 0.0
  %1225 = vmatprep.subr.mxu0 0.0
  %1226 = vmatpush1.msra.mxu0 0.0
  %1227 = vmatprep.subr.mxu0 0.0
  %1228 = vmatpush1.msra.mxu0 0.0
  %1229 = vmatprep.subr.mxu0 0.0
  %1230 = vmatpush1.msra.mxu0 0.0
  %1231 = vmatprep.subr.mxu0 0.0
  %1232 = vmatpush1.msra.mxu0 0.0
  %1233 = vmatprep.subr.mxu0 0.0
  %1234 = vmatpush1.msra.mxu0 0.0
  %1235 = vmatprep.subr.mxu0 0.0
  %1236 = vmatpush1.msra.mxu0 0.0
  %1237 = vmatprep.subr.mxu0 0.0
  %1238 = vmatpush1.msra.mxu0 0.0
  %1239 = vmatprep.subr.mxu0 0.0
  %1240 = vmatpush1.msra.mxu0 0.0
  %1241 = vmatprep.subr.mxu0 0.0
  %1242 = vmatpush1.msra.mxu0 0.0
  %1243 = vmatprep.subr.mxu0 0.0
  %1244 = vmatpush1.msra.mxu0 0.0
  %1245 = vmatprep.subr.mxu0 0.0
  %1246 = vmatpush1.msra.mxu0 0.0
  %1247 = vmatprep.subr.mxu0 0.0
  %1248 = vmatpush1.msra.mxu0 0.0
  %1249 = vmatprep.subr.mxu0 0.0
  %1250 = vmatpush1.msra.mxu0 0.0
  %1251 = vmatprep.subr.mxu0 0.0
  %1252 = vmatpush1.msra.mxu0 0.0
  %1253 = vmatprep.subr.mxu0 0.0
  %1254 = vmatpush1.msra.mxu0 0.0
  %1255 = vmatprep.subr.mxu0 0.0
  %1256 = vmatpush1.msra.mxu0 0.0
  %1257 = vmatprep.subr.mxu0 0.0
  %1258 = vmatpush1.msra.mxu0 0.0
  %1259 = vmatprep.subr.mxu0 0.0
  %1260 = vmatpush1.msra.mxu0 0.0
  %1261 = vmatprep.subr.mxu0 0.0
  %1262 = vmatpush1.msra.mxu0 0.0
  %1263 = vmatprep.subr.mxu0 0.0
  %1264 = vmatpush1.msra.mxu0 0.0
  %1265 = vmatprep.subr.mxu0 0.0
  %1266 = vmatpush1.msra.mxu0 0.0
  %1267 = vmatprep.subr.mxu0 0.0
  %1268 = vmatpush1.msra.mxu0 0.0
  %1269 = vmatprep.subr.mxu0 0.0
  %1270 = vmatpush1.msra.mxu0 0.0
  %1271 = vmatprep.subr.mxu0 0.0
  %1272 = vmatpush1.msra.mxu0 0.0
  %1273 = vmatprep.subr.mxu0 0.0
  %1274 = vmatpush1.msra.mxu0 0.0
  %1275 = vmatprep.mubr.f32.mxu0 0.0
  %1276 = vmatmul.mubr.f32.gmra.mrb[0].mxu0 %v1209
  %v1277 = vpop.f32.mrb[0].mxu0
  %v1278 = vadd.f32 %v1205, %v1277
  %v1279 = vpop.f32.mrb[0].mxu0
  %1280 = vdwg.mxu0
  %v1281 = vmax.f32 %v1278, 0.0
  %v1282 = vlaneseq
  %v1283 = vshrl.u32 %v1282, 7
  %v1284 = vsub.s32 3, %v1283
  %v1285 = vrot.slane %v23, %v1284
  %v1287 = vsel %vm171, %v1281, 0
  %1289 = vmatprep.subr.mxu0 0.0
  %1290 = vmatpush1.msra.mxu0 %v1186
  %1291 = vmatprep.subr.mxu0 0.0
  %1292 = vmatpush1.msra.mxu0 %v1187
  %1293 = vmatprep.subr.mxu0 0.0
  %1294 = vmatpush1.msra.mxu0 %v1188
  %1295 = vmatprep.subr.mxu0 0.0
  %1296 = vmatpush1.msra.mxu0 %v1189
  %1297 = vmatprep.subr.mxu0 0.0
  %1298 = vmatpush1.msra.mxu0 0.0
  %1299 = vmatprep.subr.mxu0 0.0
  %1300 = vmatpush1.msra.mxu0 0.0
  %1301 = vmatprep.subr.mxu0 0.0
  %1302 = vmatpush1.msra.mxu0 0.0
  %1303 = vmatprep.subr.mxu0 0.0
  %1304 = vmatpush1.msra.mxu0 0.0
  %1305 = vmatprep.subr.mxu0 0.0
  %1306 = vmatpush1.msra.mxu0 0.0
  %1307 = vmatprep.subr.mxu0 0.0
  %1308 = vmatpush1.msra.mxu0 0.0
  %1309 = vmatprep.subr.mxu0 0.0
  %1310 = vmatpush1.msra.mxu0 0.0
  %1311 = vmatprep.subr.mxu0 0.0
  %1312 = vmatpush1.msra.mxu0 0.0
  %1313 = vmatprep.subr.mxu0 0.0
  %1314 = vmatpush1.msra.mxu0 0.0
  %1315 = vmatprep.subr.mxu0 0.0
  %1316 = vmatpush1.msra.mxu0 0.0
  %1317 = vmatprep.subr.mxu0 0.0
  %1318 = vmatpush1.msra.mxu0 0.0
  %1319 = vmatprep.subr.mxu0 0.0
  %1320 = vmatpush1.msra.mxu0 0.0
  %1321 = vmatprep.subr.mxu0 0.0
  %1322 = vmatpush1.msra.mxu0 0.0
  %1323 = vmatprep.subr.mxu0 0.0
  %1324 = vmatpush1.msra.mxu0 0.0
  %1325 = vmatprep.subr.mxu0 0.0
  %1326 = vmatpush1.msra.mxu0 0.0
  %1327 = vmatprep.subr.mxu0 0.0
  %1328 = vmatpush1.msra.mxu0 0.0
  %1329 = vmatprep.subr.mxu0 0.0
  %1330 = vmatpush1.msra.mxu0 0.0
  %1331 = vmatprep.subr.mxu0 0.0
  %1332 = vmatpush1.msra.mxu0 0.0
  %1333 = vmatprep.subr.mxu0 0.0
  %1334 = vmatpush1.msra.mxu0 0.0
  %1335 = vmatprep.subr.mxu0 0.0
  %1336 = vmatpush1.msra.mxu0 0.0
  %1337 = vmatprep.subr.mxu0 0.0
  %1338 = vmatpush1.msra.mxu0 0.0
  %1339 = vmatprep.subr.mxu0 0.0
  %1340 = vmatpush1.msra.mxu0 0.0
  %1341 = vmatprep.subr.mxu0 0.0
  %1342 = vmatpush1.msra.mxu0 0.0
  %1343 = vmatprep.subr.mxu0 0.0
  %1344 = vmatpush1.msra.mxu0 0.0
  %1345 = vmatprep.subr.mxu0 0.0
  %1346 = vmatpush1.msra.mxu0 0.0
  %1347 = vmatprep.subr.mxu0 0.0
  %1348 = vmatpush1.msra.mxu0 0.0
  %1349 = vmatprep.subr.mxu0 0.0
  %1350 = vmatpush1.msra.mxu0 0.0
  %1351 = vmatprep.subr.mxu0 0.0
  %1352 = vmatpush1.msra.mxu0 0.0
  %1353 = vmatprep.mubr.f32.mxu0 0.0
  %1354 = vmatmul.mubr.f32.gmra.mrb[0].mxu0 %v1287
  %v1355 = vpop.f32.mrb[0].mxu0
  %v1356 = vadd.f32 %v1285, %v1355
  %v1357 = vpop.f32.mrb[0].mxu0
  %1358 = vdwg.mxu0
  %v1359 = vtanh.pop %v1356
  %v1360 = vlaneseq
  %v1361 = vshrl.u32 %v1360, 7
  %v1362 = vsub.s32 4, %v1361
  %v1363 = vrot.slane %v23, %v1362
  %v1365 = vsel %vm171, %v1359, 0
  %1367 = vmatprep.subr.mxu0 0.0
  %1368 = vmatpush1.msra.mxu0 %v1190
  %1369 = vmatprep.subr.mxu0 0.0
  %1370 = vmatpush1.msra.mxu0 %v1191
  %1371 = vmatprep.subr.mxu0 0.0
  %1372 = vmatpush1.msra.mxu0 %v1192
  %1373 = vmatprep.subr.mxu0 0.0
  %1374 = vmatpush1.msra.mxu0 %v1193
  %1375 = vmatprep.subr.mxu0 0.0
  %1376 = vmatpush1.msra.mxu0 0.0
  %1377 = vmatprep.subr.mxu0 0.0
  %1378 = vmatpush1.msra.mxu0 0.0
  %1379 = vmatprep.subr.mxu0 0.0
  %1380 = vmatpush1.msra.mxu0 0.0
  %1381 = vmatprep.subr.mxu0 0.0
  %1382 = vmatpush1.msra.mxu0 0.0
  %1383 = vmatprep.subr.mxu0 0.0
  %1384 = vmatpush1.msra.mxu0 0.0
  %1385 = vmatprep.subr.mxu0 0.0
  %1386 = vmatpush1.msra.mxu0 0.0
  %1387 = vmatprep.subr.mxu0 0.0
  %1388 = vmatpush1.msra.mxu0 0.0
  %1389 = vmatprep.subr.mxu0 0.0
  %1390 = vmatpush1.msra.mxu0 0.0
  %1391 = vmatprep.subr.mxu0 0.0
  %1392 = vmatpush1.msra.mxu0 0.0
  %1393 = vmatprep.subr.mxu0 0.0
  %1394 = vmatpush1.msra.mxu0 0.0
  %1395 = vmatprep.subr.mxu0 0.0
  %1396 = vmatpush1.msra.mxu0 0.0
  %1397 = vmatprep.subr.mxu0 0.0
  %1398 = vmatpush1.msra.mxu0 0.0
  %1399 = vmatprep.subr.mxu0 0.0
  %1400 = vmatpush1.msra.mxu0 0.0
  %1401 = vmatprep.subr.mxu0 0.0
  %1402 = vmatpush1.msra.mxu0 0.0
  %1403 = vmatprep.subr.mxu0 0.0
  %1404 = vmatpush1.msra.mxu0 0.0
  %1405 = vmatprep.subr.mxu0 0.0
  %1406 = vmatpush1.msra.mxu0 0.0
  %1407 = vmatprep.subr.mxu0 0.0
  %1408 = vmatpush1.msra.mxu0 0.0
  %1409 = vmatprep.subr.mxu0 0.0
  %1410 = vmatpush1.msra.mxu0 0.0
  %1411 = vmatprep.subr.mxu0 0.0
  %1412 = vmatpush1.msra.mxu0 0.0
  %1413 = vmatprep.subr.mxu0 0.0
  %1414 = vmatpush1.msra.mxu0 0.0
  %1415 = vmatprep.subr.mxu0 0.0
  %1416 = vmatpush1.msra.mxu0 0.0
  %1417 = vmatprep.subr.mxu0 0.0
  %1418 = vmatpush1.msra.mxu0 0.0
  %1419 = vmatprep.subr.mxu0 0.0
  %1420 = vmatpush1.msra.mxu0 0.0
  %1421 = vmatprep.subr.mxu0 0.0
  %1422 = vmatpush1.msra.mxu0 0.0
  %1423 = vmatprep.subr.mxu0 0.0
  %1424 = vmatpush1.msra.mxu0 0.0
  %1425 = vmatprep.subr.mxu0 0.0
  %1426 = vmatpush1.msra.mxu0 0.0
  %1427 = vmatprep.subr.mxu0 0.0
  %1428 = vmatpush1.msra.mxu0 0.0
  %1429 = vmatprep.subr.mxu0 0.0
  %1430 = vmatpush1.msra.mxu0 0.0
  %1431 = vmatprep.mubr.f32.mxu0 0.0
  %1432 = vmatmul.mubr.f32.gmra.mrb[0].mxu0 %v1365
  %v1433 = vpop.f32.mrb[0].mxu0
  %v1434 = vadd.f32 %v1363, %v1433
  %v1435 = vpop.f32.mrb[0].mxu0
  %1436 = vdwg.mxu0
  %v1437 = vmul.f32 %v1434, 1.442695
  %v1438 = vpow.pop %v1437
  %1441 = vrot.lane.b32.xlu0 %v1434, 32
  %v1442 = vpop.permute.xlu0 %1441
  %1445 = vrot.lane.b32.xlu0 %v1438, 32
  %v1446 = vpop.permute.xlu0 %1445
  %v1448 = vsel %vm171, %v1208, %v1442
  %vm1449 = vcmask 269312
  %v1450 = vsel %vm1449, %v1448, %v1446
  %v1451 = vlaneseq
  %v1452 = vshrl.u32 %v1451, 7
  %v1453 = vsub.s32 5, %v1452
  %v1454 = vrot.slane %v23, %v1453
  %vm1455 = vcmask 277504
  %v1457 = vsel %vm1455, %v1450, 0
  %vm1459 = vcmask 1041408
  %v1461 = vsel %vm1459, %v1198, 0
  %1463 = vmatprep.subr.mxu0 0.0
  %1464 = vmatpush1.msra.mxu0 %v1194
  %1465 = vmatprep.subr.mxu0 0.0
  %1466 = vmatpush1.msra.mxu0 %v1195
  %1467 = vmatprep.subr.mxu0 0.0
  %1468 = vmatpush1.msra.mxu0 %v1196
  %1469 = vmatprep.subr.mxu0 0.0
  %1470 = vmatpush1.msra.mxu0 %v1197
  %1471 = vmatprep.subr.mxu0 0.0
  %1472 = vmatpush1.msra.mxu0 %v1461
  %1473 = vmatprep.subr.mxu0 0.0
  %1474 = vmatpush1.msra.mxu0 0.0
  %1475 = vmatprep.subr.mxu0 0.0
  %1476 = vmatpush1.msra.mxu0 0.0
  %1477 = vmatprep.subr.mxu0 0.0
  %1478 = vmatpush1.msra.mxu0 0.0
  %1479 = vmatprep.subr.mxu0 0.0
  %1480 = vmatpush1.msra.mxu0 0.0
  %1481 = vmatprep.subr.mxu0 0.0
  %1482 = vmatpush1.msra.mxu0 0.0
  %1483 = vmatprep.subr.mxu0 0.0
  %1484 = vmatpush1.msra.mxu0 0.0
  %1485 = vmatprep.subr.mxu0 0.0
  %1486 = vmatpush1.msra.mxu0 0.0
  %1487 = vmatprep.subr.mxu0 0.0
  %1488 = vmatpush1.msra.mxu0 0.0
  %1489 = vmatprep.subr.mxu0 0.0
  %1490 = vmatpush1.msra.mxu0 0.0
  %1491 = vmatprep.subr.mxu0 0.0
  %1492 = vmatpush1.msra.mxu0 0.0
  %1493 = vmatprep.subr.mxu0 0.0
  %1494 = vmatpush1.msra.mxu0 0.0
  %1495 = vmatprep.subr.mxu0 0.0
  %1496 = vmatpush1.msra.mxu0 0.0
  %1497 = vmatprep.subr.mxu0 0.0
  %1498 = vmatpush1.msra.mxu0 0.0
  %1499 = vmatprep.subr.mxu0 0.0
  %1500 = vmatpush1.msra.mxu0 0.0
  %1501 = vmatprep.subr.mxu0 0.0
  %1502 = vmatpush1.msra.mxu0 0.0
  %1503 = vmatprep.subr.mxu0 0.0
  %1504 = vmatpush1.msra.mxu0 0.0
  %1505 = vmatprep.subr.mxu0 0.0
  %1506 = vmatpush1.msra.mxu0 0.0
  %1507 = vmatprep.subr.mxu0 0.0
  %1508 = vmatpush1.msra.mxu0 0.0
  %1509 = vmatprep.subr.mxu0 0.0
  %1510 = vmatpush1.msra.mxu0 0.0
  %1511 = vmatprep.subr.mxu0 0.0
  %1512 = vmatpush1.msra.mxu0 0.0
  %1513 = vmatprep.subr.mxu0 0.0
  %1514 = vmatpush1.msra.mxu0 0.0
  %1515 = vmatprep.subr.mxu0 0.0
  %1516 = vmatpush1.msra.mxu0 0.0
  %1517 = vmatprep.subr.mxu0 0.0
  %1518 = vmatpush1.msra.mxu0 0.0
  %1519 = vmatprep.subr.mxu0 0.0
  %1520 = vmatpush1.msra.mxu0 0.0
  %1521 = vmatprep.subr.mxu0 0.0
  %1522 = vmatpush1.msra.mxu0 0.0
  %1523 = vmatprep.subr.mxu0 0.0
  %1524 = vmatpush1.msra.mxu0 0.0
  %1525 = vmatprep.subr.mxu0 0.0
  %1526 = vmatpush1.msra.mxu0 0.0
  %1527 = vmatprep.mubr.f32.mxu0 0.0
  %1528 = vmatmul.mubr.f32.gmra.mrb[0].mxu0 %v1457
  %v1529 = vpop.f32.mrb[0].mxu0
  %v1530 = vadd.f32 %v1454, %v1529
  %v1531 = vpop.f32.mrb[0].mxu0
  %1532 = vdwg.mxu0
  %v1533 = vtanh.pop %v1530
  %1535 = vrot.lane.b32.xlu0 %v1363, 126
  %v1536 = vpop.permute.xlu0 %1535
  %vm1538 = vcmask 138240
  %v1540 = vsel %vm1538, %v1533, 0
  %vm1542 = vcmask 1040384
  %v1544 = vsel %vm1542, %v1201, 0
  %1546 = vmatprep.subr.mxu0 0.0
  %1547 = vmatpush1.msra.mxu0 %v1199
  %1548 = vmatprep.subr.mxu0 0.0
  %1549 = vmatpush1.msra.mxu0 %v1200
  %1550 = vmatprep.subr.mxu0 0.0
  %1551 = vmatpush1.msra.mxu0 %v1544
  %1552 = vmatprep.subr.mxu0 0.0
  %1553 = vmatpush1.msra.mxu0 0.0
  %1554 = vmatprep.subr.mxu0 0.0
  %1555 = vmatpush1.msra.mxu0 0.0
  %1556 = vmatprep.subr.mxu0 0.0
  %1557 = vmatpush1.msra.mxu0 0.0
  %1558 = vmatprep.subr.mxu0 0.0
  %1559 = vmatpush1.msra.mxu0 0.0
  %1560 = vmatprep.subr.mxu0 0.0
  %1561 = vmatpush1.msra.mxu0 0.0
  %1562 = vmatprep.subr.mxu0 0.0
  %1563 = vmatpush1.msra.mxu0 0.0
  %1564 = vmatprep.subr.mxu0 0.0
  %1565 = vmatpush1.msra.mxu0 0.0
  %1566 = vmatprep.subr.mxu0 0.0
  %1567 = vmatpush1.msra.mxu0 0.0
  %1568 = vmatprep.subr.mxu0 0.0
  %1569 = vmatpush1.msra.mxu0 0.0
  %1570 = vmatprep.subr.mxu0 0.0
  %1571 = vmatpush1.msra.mxu0 0.0
  %1572 = vmatprep.subr.mxu0 0.0
  %1573 = vmatpush1.msra.mxu0 0.0
  %1574 = vmatprep.subr.mxu0 0.0
  %1575 = vmatpush1.msra.mxu0 0.0
  %1576 = vmatprep.subr.mxu0 0.0
  %1577 = vmatpush1.msra.mxu0 0.0
  %1578 = vmatprep.subr.mxu0 0.0
  %1579 = vmatpush1.msra.mxu0 0.0
  %1580 = vmatprep.subr.mxu0 0.0
  %1581 = vmatpush1.msra.mxu0 0.0
  %1582 = vmatprep.subr.mxu0 0.0
  %1583 = vmatpush1.msra.mxu0 0.0
  %1584 = vmatprep.subr.mxu0 0.0
  %1585 = vmatpush1.msra.mxu0 0.0
  %1586 = vmatprep.subr.mxu0 0.0
  %1587 = vmatpush1.msra.mxu0 0.0
  %1588 = vmatprep.subr.mxu0 0.0
  %1589 = vmatpush1.msra.mxu0 0.0
  %1590 = vmatprep.subr.mxu0 0.0
  %1591 = vmatpush1.msra.mxu0 0.0
  %1592 = vmatprep.subr.mxu0 0.0
  %1593 = vmatpush1.msra.mxu0 0.0
  %1594 = vmatprep.subr.mxu0 0.0
  %1595 = vmatpush1.msra.mxu0 0.0
  %1596 = vmatprep.subr.mxu0 0.0
  %1597 = vmatpush1.msra.mxu0 0.0
  %1598 = vmatprep.subr.mxu0 0.0
  %1599 = vmatpush1.msra.mxu0 0.0
  %1600 = vmatprep.subr.mxu0 0.0
  %1601 = vmatpush1.msra.mxu0 0.0
  %1602 = vmatprep.subr.mxu0 0.0
  %1603 = vmatpush1.msra.mxu0 0.0
  %1604 = vmatprep.subr.mxu0 0.0
  %1605 = vmatpush1.msra.mxu0 0.0
  %1606 = vmatprep.subr.mxu0 0.0
  %1607 = vmatpush1.msra.mxu0 0.0
  %1608 = vmatprep.subr.mxu0 0.0
  %1609 = vmatpush1.msra.mxu0 0.0
  %1610 = vmatprep.mubr.f32.mxu0 0.0
  %1611 = vmatmul.mubr.f32.gmra.mrb[0].mxu0 %v1540
  %v1612 = vpop.f32.mrb[0].mxu0
  %v1613 = vadd.f32 %v1536, %v1612
  %v1614 = vpop.f32.mrb[0].mxu0
  %1615 = vdwg.mxu0
  %v1616 = vmul.f32 %v1613, 0.25
  %v1617 = vmul.f32 %v1616, 1.442695
  %v1618 = vpow.pop %v1617
  %v1619 = vld [vmem:[%s1] sm:$0x3]
  %1620 = vrot.lane.b32.xlu0 %v1438, 127
  %v1621 = vpop.permute.xlu0 %1620
  %v1623 = vmul.f32 %v1619, %v1621
  %v1624 = vadd.f32 %v1623, %v1434
  %v1625 = vtanh.pop %v1624
  %v1626 = vadd.f32 %v1618, 1.0
  %v1627 = vmul.f32 %v1625, %v1626
  %v1628 = vmul.f32 %v1627, %v1626
  %v1629 = vmul.f32 %v1628, %v68
  %vm1630 = vcmask 1024
  %1631 = vst.msk [vmem:[%s6] sm:$0x3] %vm1630, %v1629
  // Predicated region
  $region26: #{salstm4_forward.1} parent=0 // pred_check
    _
  $region27: #{salstm4_forward.1} parent=0 // pred_check_branch
    %1633 = sbr.rel (0) target = $region29
  $region28: #{salstm4_forward.1} parent=0 // pred_region
    _
  $region29: #{salstm4_forward.1} parent=0 // pred_fallthru
    _
  // Predicated region
  $region30: #{salstm4_forward.1} parent=0 // pred_check
    _
  $region31: #{salstm4_forward.1} parent=0 // pred_check_branch
    %1635 = sbr.rel (0) target = $region33
  $region32: #{salstm4_forward.1} parent=0 // pred_region
    _
  $region33: #{salstm4_forward.1} parent=0 // pred_fallthru
    _

</llo_original>
